<compile_context>
chip_gen: v7x
topology: tpu7x:2x2x1
jax: 0.10.0
libtpu: 0.0.40
codegen_flags: <defaults>
</compile_context>

<pallas_src>
import functools

import jax
import jax.numpy as jnp
import numpy as np
from jax import lax
from jax.experimental import pallas as pl
from jax.experimental.pallas import tpu as pltpu

CP = 128  # padded channel (lane) width


# ---------------------------------------------------------------------------
# Pallas kernel: the whole TCN (all TemporalBlocks) fused in one kernel body
# ---------------------------------------------------------------------------
def tcn_fused_kernel(x_ref, w_ref, b_ref, o_ref, *, plan, K, L, cp):
    """One row-tile of the whole network.

    x_ref : (TM, cp) f32   rows = whole length-L sequences, channels lane-padded
    w_ref : (NE, K*cp, cp) bf16  packed conv/downsample weights (one entry each)
    b_ref : (NE, cp) f32         packed biases (entry index matches w_ref)
    o_ref : (TM, cp) f32
    plan  : static tuple of (dilation, conv1_idx, conv2_idx, has_down, down_idx)
    """
    TM = x_ref.shape[0]

    # Precompute per-shift masks once (hoisted out of all layers/taps).
    row_t = lax.broadcasted_iota(jnp.int32, (TM, cp), 0) % L
    shifts = sorted({(K - 1 - k) * d for (d, *_rest) in plan for k in range(K)})
    masks = {s: (row_t >= s) for s in shifts if 0 < s < L}

    def shift_rows(a, s):
        # Causal shift by s within each length-L sequence: out[t] = a[t - s],
        # zero for t < s.  Sublane roll (XLU) + mask (VPU select); no
        # unaligned concatenates, batch-size independent.
        if s == 0:
            return a
        if s >= L:
            return jnp.zeros_like(a)
        rolled = pltpu.roll(a, shift=s, axis=0)          # out[r] = a[r - s]
        return jnp.where(masks[s], rolled, 0.0)          # kill cross-seq wrap

    def causal_conv(h, entry, dilation):
        # Conv1d(kernel=K, dilation=d, padding=(K-1)*d) + Chomp1d as one
        # im2col matmul: lanes [k*cp:(k+1)*cp] of the LHS hold the input
        # shifted by (K-1-k)*d; the packed weight entry stacks the K taps
        # along its contraction rows.  Single bf16 cast per conv; f32 acc.
        parts = [shift_rows(h, (K - 1 - k) * dilation) for k in range(K)]
        lhs = jnp.concatenate(parts, axis=1).astype(jnp.bfloat16)   # (TM, K*cp)
        y = jnp.dot(lhs, w_ref[entry], preferred_element_type=jnp.float32)
        return y + b_ref[pl.ds(entry, 1), :]             # (1, cp) broadcast

    h = x_ref[...]                                       # f32 residual path
    for (dilation, c1, c2, has_down, cd) in plan:
        o1 = jnp.maximum(causal_conv(h, c1, dilation), 0.0)   # relu1 (dropout=id)
        o2 = jnp.maximum(causal_conv(o1, c2, dilation), 0.0)  # relu2 (dropout=id)
        if has_down:
            wd = w_ref[cd][:cp, :]                       # 1x1 conv weight
            res = jnp.dot(h.astype(jnp.bfloat16), wd,
                          preferred_element_type=jnp.float32) + b_ref[pl.ds(cd, 1), :]
        else:
            res = h
        h = jnp.maximum(o2 + res, 0.0)                   # final block relu
    o_ref[...] = h


# ---------------------------------------------------------------------------
# Wrapper: one pallas_call for the whole network
# ---------------------------------------------------------------------------
def tcn_forward(x_ncl, w_slab, b_slab, plan, *, K, cout_last, cp=CP):
    B, C0, L = x_ncl.shape
    # Fold batch into the matmul M dimension and lane-pad channels to cp.
    x_rows = jnp.transpose(x_ncl, (0, 2, 1)).reshape(B * L, C0).astype(jnp.float32)
    x_rows = jnp.pad(x_rows, ((0, 0), (0, cp - C0)))

    # Row tile: whole sequences per tile (so roll+mask never crosses a tile)
    # and a multiple of 8 sublanes.
    seqs = None
    for s in range(1, B + 1):
        if B % s == 0 and (L * s) % 8 == 0:
            seqs = s
            break
    if seqs is None:
        seqs = B
    TM = L * seqs
    assert (B * L) % TM == 0 and TM % 8 == 0, "pad L/B for sublane alignment"
    n_tiles = (B * L) // TM

    NE = w_slab.shape[0]
    kernel = functools.partial(tcn_fused_kernel, plan=plan, K=K, L=L, cp=cp)

    out_rows = pl.pallas_call(
        kernel,
        out_shape=jax.ShapeDtypeStruct((B * L, cp), jnp.float32),
        grid=(n_tiles,),
        in_specs=[
            pl.BlockSpec((TM, cp), lambda i: (i, 0)),
            # Constant index maps: weight/bias slabs are DMA'd once and stay
            # resident across the (parallel) row-tile grid.
            pl.BlockSpec((NE, K * cp, cp), lambda i: (0, 0, 0)),
            pl.BlockSpec((NE, cp), lambda i: (0, 0)),
        ],
        out_specs=pl.BlockSpec((TM, cp), lambda i: (i, 0)),
        compiler_params=pltpu.CompilerParams(
            dimension_semantics=("parallel",),
            vmem_limit_bytes=32 * 1024 * 1024,   # safe on v5e/v6e/v7x budgets
        ),
    )(x_rows, w_slab, b_slab)

    # (B*L, cp) -> slice real channels -> (B, Cout, L) PyTorch layout.
    return jnp.transpose(out_rows[:, :cout_last].reshape(B, L, cout_last), (0, 2, 1))


# ---------------------------------------------------------------------------
# Deterministic parameter init (torch-layout f32, for packing + reference)
# ---------------------------------------------------------------------------
def _weight_norm_init(key, cout, cin, K):
    # weight_norm(Conv1d): effective weight = g * v / ||v|| (== v at init).
    v = 0.01 * jax.random.normal(key, (cout, cin, K), jnp.float32)
    norm = jnp.sqrt(jnp.sum(v * v, axis=(1, 2), keepdims=True))
    return norm * v / norm  # (O, I, K)


def init_tcn_params(key, num_inputs, num_channels, K):
    blocks = []
    cin = num_inputs
    for cout in num_channels:
        key, k1, k2, k3, k4, k5, k6 = jax.random.split(key, 7)
        w1 = _weight_norm_init(k1, cout, cin, K)
        w2 = _weight_norm_init(k2, cout, cout, K)
        bound1 = 1.0 / np.sqrt(cin * K)
        bound2 = 1.0 / np.sqrt(cout * K)
        p = {
            "w1_oik": w1,
            "b1": jax.random.uniform(k3, (cout,), jnp.float32, -bound1, bound1),
            "w2_oik": w2,
            "b2": jax.random.uniform(k4, (cout,), jnp.float32, -bound2, bound2),
        }
        if cin != cout:
            p["wd_oik"] = 0.01 * jax.random.normal(k5, (cout, cin, 1), jnp.float32)
            bd_bound = 1.0 / np.sqrt(cin)
            p["bd"] = jax.random.uniform(k6, (cout,), jnp.float32, -bd_bound, bd_bound)
        blocks.append(p)
        cin = cout
    return blocks


def pack_tcn_params(blocks, num_inputs, K, cp=CP):
    """Pack all layer weights into one bf16 slab and one f32 bias slab.

    Weight entry layout (K*cp, cp): rows [k*cp : k*cp+cin] hold W_k^T, i.e. the
    (cin, cout) matrix of tap k, matching lanes [k*cp:(k+1)*cp] of the im2col
    LHS built in the kernel.  Downsample entries use only the first cp rows.
    Extra rows/cols are zero, so padded channels stay exactly zero end-to-end.
    """
    n_entries = sum(2 + (1 if "wd_oik" in p else 0) for p in blocks)
    w_slab = np.zeros((n_entries, K * cp, cp), np.float32)
    b_slab = np.zeros((n_entries, cp), np.float32)

    plan = []
    idx = 0
    cin = num_inputs
    for i, p in enumerate(blocks):
        d = 2 ** i
        cout = p["w1_oik"].shape[0]

        w1 = np.asarray(p["w1_oik"], np.float32)           # (O, I, K)
        for k in range(K):
            w_slab[idx, k * cp:k * cp + cin, :cout] = w1[:, :, k].T
        b_slab[idx, :cout] = np.asarray(p["b1"])
        c1 = idx
        idx += 1

        w2 = np.asarray(p["w2_oik"], np.float32)
        for k in range(K):
            w_slab[idx, k * cp:k * cp + cout, :cout] = w2[:, :, k].T
        b_slab[idx, :cout] = np.asarray(p["b2"])
        c2 = idx
        idx += 1

        has_down = "wd_oik" in p
        cd = -1
        if has_down:
            wd = np.asarray(p["wd_oik"], np.float32)[:, :, 0]   # (O, I)
            w_slab[idx, :cin, :cout] = wd.T
            b_slab[idx, :cout] = np.asarray(p["bd"])
            cd = idx
            idx += 1

        plan.append((d, c1, c2, has_down, cd))
        cin = cout

    return (jnp.asarray(w_slab, jnp.bfloat16),
            jnp.asarray(b_slab, jnp.float32),
            tuple(plan),
            cin)


# ---------------------------------------------------------------------------
# Pure-JAX reference (PyTorch semantics, full f32) for validation
# ---------------------------------------------------------------------------
def ref_tcn(x_ncl, blocks, *, K):
    h = x_ncl.astype(jnp.float32)
    for i, p in enumerate(blocks):
        d = 2 ** i
        P = (K - 1) * d
        L = h.shape[2]

        def conv(inp, w_oik, b, dil, pad):
            out = lax.conv_general_dilated(
                inp, w_oik, window_strides=(1,), padding=[(pad, pad)],
                rhs_dilation=(dil,), dimension_numbers=("NCH", "OIH", "NCH"),
            )
            return out + b.reshape(1, -1, 1)

        o = conv(h, p["w1_oik"], p["b1"], d, P)[:, :, :L]     # chomp1
        o = jnp.maximum(o, 0.0)                               # relu1 (dropout = id)
        o = conv(o, p["w2_oik"], p["b2"], d, P)[:, :, :L]     # chomp2
        o = jnp.maximum(o, 0.0)                               # relu2 (dropout = id)
        if "wd_oik" in p:
            res = conv(h, p["wd_oik"], p["bd"], 1, 0)
        else:
            res = h
        h = jnp.maximum(o + res, 0.0)
    return h


# ---------------------------------------------------------------------------
if __name__ == "__main__":
    key = jax.random.PRNGKey(0)
    key, kx, kp = jax.random.split(key, 3)

    # TemporalConvNet(num_inputs=4, num_channels=[8, 16, 16], kernel_size=2)
    num_inputs = 4
    num_channels = [8, 16, 16]
    K = 2
    B, L = 2, 16

    x = jax.random.normal(kx, (B, num_inputs, L), jnp.float32)  # PyTorch NCL
    blocks = init_tcn_params(kp, num_inputs, num_channels, K)
    w_slab, b_slab, plan, cout_last = pack_tcn_params(blocks, num_inputs, K)

    out = tcn_forward(x, w_slab, b_slab, plan, K=K, cout_last=cout_last)
    out = jax.block_until_ready(out)

    ref = jax.block_until_ready(ref_tcn(x, blocks, K=K))
    assert out.shape == (B, num_channels[-1], L), out.shape
    # Tolerance accounts for bf16 matmul operands (f32 accumulation / bias /
    # residual math).
    np.testing.assert_allclose(np.asarray(out), np.asarray(ref), rtol=5e-2, atol=5e-3)

    print("KERNEL_OK")
</pallas_src>

<mosaic_0001>
module attributes {stable_mosaic.version = 11 : i64} {
  func.func @tcn_fused_kernel(%arg0: i32, %arg1: memref<16x128xf32, #tpu.memory_space<vmem>>, %arg2: memref<8x256x128xbf16, #tpu.memory_space<vmem>>, %arg3: memref<8x128xf32, #tpu.memory_space<vmem>>, %arg4: memref<16x128xf32, #tpu.memory_space<vmem>>) attributes {dimension_semantics = [#tpu.dimension_semantics<parallel>], iteration_bounds = array<i64: 2>, scalar_prefetch = 0 : i64, scratch_operands = 0 : i64, tpu.core_type = #tpu.core_type<tc>, window_params = [{transform_indices = @transform_0, window_bounds = array<i64: 16, 128>}, {pipeline_mode = #tpu.pipeline_mode<synchronous>, transform_indices = @transform_1, window_bounds = array<i64: 8, 256, 128>}, {pipeline_mode = #tpu.pipeline_mode<synchronous>, transform_indices = @transform_2, window_bounds = array<i64: 8, 128>}, {transform_indices = @transform_3, window_bounds = array<i64: 16, 128>}]} {
    %0 = tpu.iota {dimensions = array<i32: 0>} : vector<16x128xi32>
    %c16_i32 = arith.constant 16 : i32
    %c0_i32 = arith.constant 0 : i32
    %1 = arith.cmpi eq, %c16_i32, %c0_i32 : i32
    %c1_i32 = arith.constant 1 : i32
    %2 = arith.select %1, %c1_i32, %c16_i32 : i32
    %3 = vector.broadcast %2 : i32 to vector<16x128xi32>
    %4 = arith.remsi %0, %3 : vector<16x128xi32>
    %c0_i32_0 = arith.constant 0 : i32
    %5 = vector.broadcast %c0_i32_0 : i32 to vector<16x128xi32>
    %6 = arith.cmpi ne, %4, %5 : vector<16x128xi32>
    %c0_i32_1 = arith.constant 0 : i32
    %7 = vector.broadcast %c0_i32_1 : i32 to vector<16x128xi32>
    %8 = arith.cmpi slt, %4, %7 : vector<16x128xi32>
    %c0_i32_2 = arith.constant 0 : i32
    %9 = arith.cmpi slt, %2, %c0_i32_2 : i32
    %10 = vector.broadcast %9 : i1 to vector<16x128xi1>
    %11 = vector.broadcast %10 : vector<16x128xi1> to vector<16x128xi1>
    %12 = arith.xori %8, %11 : vector<16x128xi1>
    %13 = arith.andi %12, %6 : vector<16x128xi1>
    %14 = vector.broadcast %2 : i32 to vector<16x128xi32>
    %15 = arith.addi %4, %14 : vector<16x128xi32>
    %16 = arith.select %13, %15, %4 : vector<16x128xi1>, vector<16x128xi32>
    %c1_i32_3 = arith.constant 1 : i32
    %17 = vector.broadcast %c1_i32_3 : i32 to vector<16x128xi32>
    %18 = arith.cmpi sge, %16, %17 : vector<16x128xi32>
    %c2_i32 = arith.constant 2 : i32
    %19 = vector.broadcast %c2_i32 : i32 to vector<16x128xi32>
    %20 = arith.cmpi sge, %16, %19 : vector<16x128xi32>
    %c4_i32 = arith.constant 4 : i32
    %21 = vector.broadcast %c4_i32 : i32 to vector<16x128xi32>
    %22 = arith.cmpi sge, %16, %21 : vector<16x128xi32>
    %c0 = arith.constant 0 : index
    %c0_4 = arith.constant 0 : index
    %23 = vector.load %arg1[%c0, %c0_4] : memref<16x128xf32, #tpu.memory_space<vmem>>, vector<16x128xf32>
    %c1_i32_5 = arith.constant 1 : i32
    %24 = tpu.dynamic_rotate %23 by %c1_i32_5 dim 0 : vector<16x128xf32>, i32 -> vector<16x128xf32>
    %cst = arith.constant 0.000000e+00 : f32
    %25 = vector.broadcast %cst : f32 to vector<16x128xf32>
    %26 = arith.select %18, %24, %25 : vector<16x128xi1>, vector<16x128xf32>
    %27 = tpu.concatenate %26, %23 in 1 : vector<16x128xf32>, vector<16x128xf32> -> vector<16x256xf32>
    %28 = arith.truncf %27 : vector<16x256xf32> to vector<16x256xbf16>
    %c0_6 = arith.constant 0 : index
    %c0_7 = arith.constant 0 : index
    %c0_8 = arith.constant 0 : index
    %29 = vector.load %arg2[%c0_6, %c0_7, %c0_8] : memref<8x256x128xbf16, #tpu.memory_space<vmem>>, vector<1x256x128xbf16>
    %30 = vector.shape_cast %29 : vector<1x256x128xbf16> to vector<256x128xbf16>
    %cst_9 = arith.constant dense<0.000000e+00> : vector<16x128xf32>
    %31 = tpu.matmul %28, %30, %cst_9 {dimension_numbers = #tpu.dot_dimension_numbers<[1], [0], [0], [1], [0, 0, 1, 1], [], []>} : vector<16x256xbf16>, vector<256x128xbf16>, vector<16x128xf32> -> vector<16x128xf32>
    %c0_10 = arith.constant 0 : index
    %c0_11 = arith.constant 0 : index
    %32 = vector.load %arg3[%c0_10, %c0_11] : memref<8x128xf32, #tpu.memory_space<vmem>>, vector<1x128xf32>
    %33 = vector.broadcast %32 : vector<1x128xf32> to vector<16x128xf32>
    %34 = arith.addf %31, %33 : vector<16x128xf32>
    %cst_12 = arith.constant 0.000000e+00 : f32
    %35 = vector.broadcast %cst_12 : f32 to vector<16x128xf32>
    %36 = arith.maximumf %34, %35 : vector<16x128xf32>
    %c1_i32_13 = arith.constant 1 : i32
    %37 = tpu.dynamic_rotate %36 by %c1_i32_13 dim 0 : vector<16x128xf32>, i32 -> vector<16x128xf32>
    %cst_14 = arith.constant 0.000000e+00 : f32
    %38 = vector.broadcast %cst_14 : f32 to vector<16x128xf32>
    %39 = arith.select %18, %37, %38 : vector<16x128xi1>, vector<16x128xf32>
    %40 = tpu.concatenate %39, %36 in 1 : vector<16x128xf32>, vector<16x128xf32> -> vector<16x256xf32>
    %41 = arith.truncf %40 : vector<16x256xf32> to vector<16x256xbf16>
    %c1 = arith.constant 1 : index
    %c0_15 = arith.constant 0 : index
    %c0_16 = arith.constant 0 : index
    %42 = vector.load %arg2[%c1, %c0_15, %c0_16] : memref<8x256x128xbf16, #tpu.memory_space<vmem>>, vector<1x256x128xbf16>
    %43 = vector.shape_cast %42 : vector<1x256x128xbf16> to vector<256x128xbf16>
    %cst_17 = arith.constant dense<0.000000e+00> : vector<16x128xf32>
    %44 = tpu.matmul %41, %43, %cst_17 {dimension_numbers = #tpu.dot_dimension_numbers<[1], [0], [0], [1], [0, 0, 1, 1], [], []>} : vector<16x256xbf16>, vector<256x128xbf16>, vector<16x128xf32> -> vector<16x128xf32>
    %c1_18 = arith.constant 1 : index
    %c0_19 = arith.constant 0 : index
    %45 = vector.load %arg3[%c1_18, %c0_19] : memref<8x128xf32, #tpu.memory_space<vmem>>, vector<1x128xf32>
    %46 = vector.broadcast %45 : vector<1x128xf32> to vector<16x128xf32>
    %47 = arith.addf %44, %46 : vector<16x128xf32>
    %cst_20 = arith.constant 0.000000e+00 : f32
    %48 = vector.broadcast %cst_20 : f32 to vector<16x128xf32>
    %49 = arith.maximumf %47, %48 : vector<16x128xf32>
    %c2 = arith.constant 2 : index
    %c0_21 = arith.constant 0 : index
    %c0_22 = arith.constant 0 : index
    %50 = vector.load %arg2[%c2, %c0_21, %c0_22] : memref<8x256x128xbf16, #tpu.memory_space<vmem>>, vector<1x256x128xbf16>
    %51 = vector.shape_cast %50 : vector<1x256x128xbf16> to vector<256x128xbf16>
    %52 = vector.extract_strided_slice %51 {offsets = [0, 0], sizes = [128, 128], strides = [1, 1]} : vector<256x128xbf16> to vector<128x128xbf16>
    %53 = arith.truncf %23 : vector<16x128xf32> to vector<16x128xbf16>
    %cst_23 = arith.constant dense<0.000000e+00> : vector<16x128xf32>
    %54 = tpu.matmul %53, %52, %cst_23 {dimension_numbers = #tpu.dot_dimension_numbers<[1], [0], [0], [1], [0, 0, 1, 1], [], []>} : vector<16x128xbf16>, vector<128x128xbf16>, vector<16x128xf32> -> vector<16x128xf32>
    %c2_24 = arith.constant 2 : index
    %c0_25 = arith.constant 0 : index
    %55 = vector.load %arg3[%c2_24, %c0_25] : memref<8x128xf32, #tpu.memory_space<vmem>>, vector<1x128xf32>
    %56 = vector.broadcast %55 : vector<1x128xf32> to vector<16x128xf32>
    %57 = arith.addf %54, %56 : vector<16x128xf32>
    %58 = arith.addf %49, %57 : vector<16x128xf32>
    %cst_26 = arith.constant 0.000000e+00 : f32
    %59 = vector.broadcast %cst_26 : f32 to vector<16x128xf32>
    %60 = arith.maximumf %58, %59 : vector<16x128xf32>
    %c2_i32_27 = arith.constant 2 : i32
    %61 = tpu.dynamic_rotate %60 by %c2_i32_27 dim 0 : vector<16x128xf32>, i32 -> vector<16x128xf32>
    %cst_28 = arith.constant 0.000000e+00 : f32
    %62 = vector.broadcast %cst_28 : f32 to vector<16x128xf32>
    %63 = arith.select %20, %61, %62 : vector<16x128xi1>, vector<16x128xf32>
    %64 = tpu.concatenate %63, %60 in 1 : vector<16x128xf32>, vector<16x128xf32> -> vector<16x256xf32>
    %65 = arith.truncf %64 : vector<16x256xf32> to vector<16x256xbf16>
    %c3 = arith.constant 3 : index
    %c0_29 = arith.constant 0 : index
    %c0_30 = arith.constant 0 : index
    %66 = vector.load %arg2[%c3, %c0_29, %c0_30] : memref<8x256x128xbf16, #tpu.memory_space<vmem>>, vector<1x256x128xbf16>
    %67 = vector.shape_cast %66 : vector<1x256x128xbf16> to vector<256x128xbf16>
    %cst_31 = arith.constant dense<0.000000e+00> : vector<16x128xf32>
    %68 = tpu.matmul %65, %67, %cst_31 {dimension_numbers = #tpu.dot_dimension_numbers<[1], [0], [0], [1], [0, 0, 1, 1], [], []>} : vector<16x256xbf16>, vector<256x128xbf16>, vector<16x128xf32> -> vector<16x128xf32>
    %c3_32 = arith.constant 3 : index
    %c0_33 = arith.constant 0 : index
    %69 = vector.load %arg3[%c3_32, %c0_33] : memref<8x128xf32, #tpu.memory_space<vmem>>, vector<1x128xf32>
    %70 = vector.broadcast %69 : vector<1x128xf32> to vector<16x128xf32>
    %71 = arith.addf %68, %70 : vector<16x128xf32>
    %cst_34 = arith.constant 0.000000e+00 : f32
    %72 = vector.broadcast %cst_34 : f32 to vector<16x128xf32>
    %73 = arith.maximumf %71, %72 : vector<16x128xf32>
    %c2_i32_35 = arith.constant 2 : i32
    %74 = tpu.dynamic_rotate %73 by %c2_i32_35 dim 0 : vector<16x128xf32>, i32 -> vector<16x128xf32>
    %cst_36 = arith.constant 0.000000e+00 : f32
    %75 = vector.broadcast %cst_36 : f32 to vector<16x128xf32>
    %76 = arith.select %20, %74, %75 : vector<16x128xi1>, vector<16x128xf32>
    %77 = tpu.concatenate %76, %73 in 1 : vector<16x128xf32>, vector<16x128xf32> -> vector<16x256xf32>
    %78 = arith.truncf %77 : vector<16x256xf32> to vector<16x256xbf16>
    %c4 = arith.constant 4 : index
    %c0_37 = arith.constant 0 : index
    %c0_38 = arith.constant 0 : index
    %79 = vector.load %arg2[%c4, %c0_37, %c0_38] : memref<8x256x128xbf16, #tpu.memory_space<vmem>>, vector<1x256x128xbf16>
    %80 = vector.shape_cast %79 : vector<1x256x128xbf16> to vector<256x128xbf16>
    %cst_39 = arith.constant dense<0.000000e+00> : vector<16x128xf32>
    %81 = tpu.matmul %78, %80, %cst_39 {dimension_numbers = #tpu.dot_dimension_numbers<[1], [0], [0], [1], [0, 0, 1, 1], [], []>} : vector<16x256xbf16>, vector<256x128xbf16>, vector<16x128xf32> -> vector<16x128xf32>
    %c4_40 = arith.constant 4 : index
    %c0_41 = arith.constant 0 : index
    %82 = vector.load %arg3[%c4_40, %c0_41] : memref<8x128xf32, #tpu.memory_space<vmem>>, vector<1x128xf32>
    %83 = vector.broadcast %82 : vector<1x128xf32> to vector<16x128xf32>
    %84 = arith.addf %81, %83 : vector<16x128xf32>
    %cst_42 = arith.constant 0.000000e+00 : f32
    %85 = vector.broadcast %cst_42 : f32 to vector<16x128xf32>
    %86 = arith.maximumf %84, %85 : vector<16x128xf32>
    %c5 = arith.constant 5 : index
    %c0_43 = arith.constant 0 : index
    %c0_44 = arith.constant 0 : index
    %87 = vector.load %arg2[%c5, %c0_43, %c0_44] : memref<8x256x128xbf16, #tpu.memory_space<vmem>>, vector<1x256x128xbf16>
    %88 = vector.shape_cast %87 : vector<1x256x128xbf16> to vector<256x128xbf16>
    %89 = vector.extract_strided_slice %88 {offsets = [0, 0], sizes = [128, 128], strides = [1, 1]} : vector<256x128xbf16> to vector<128x128xbf16>
    %90 = arith.truncf %60 : vector<16x128xf32> to vector<16x128xbf16>
    %cst_45 = arith.constant dense<0.000000e+00> : vector<16x128xf32>
    %91 = tpu.matmul %90, %89, %cst_45 {dimension_numbers = #tpu.dot_dimension_numbers<[1], [0], [0], [1], [0, 0, 1, 1], [], []>} : vector<16x128xbf16>, vector<128x128xbf16>, vector<16x128xf32> -> vector<16x128xf32>
    %c5_46 = arith.constant 5 : index
    %c0_47 = arith.constant 0 : index
    %92 = vector.load %arg3[%c5_46, %c0_47] : memref<8x128xf32, #tpu.memory_space<vmem>>, vector<1x128xf32>
    %93 = vector.broadcast %92 : vector<1x128xf32> to vector<16x128xf32>
    %94 = arith.addf %91, %93 : vector<16x128xf32>
    %95 = arith.addf %86, %94 : vector<16x128xf32>
    %cst_48 = arith.constant 0.000000e+00 : f32
    %96 = vector.broadcast %cst_48 : f32 to vector<16x128xf32>
    %97 = arith.maximumf %95, %96 : vector<16x128xf32>
    %c4_i32_49 = arith.constant 4 : i32
    %98 = tpu.dynamic_rotate %97 by %c4_i32_49 dim 0 : vector<16x128xf32>, i32 -> vector<16x128xf32>
    %cst_50 = arith.constant 0.000000e+00 : f32
    %99 = vector.broadcast %cst_50 : f32 to vector<16x128xf32>
    %100 = arith.select %22, %98, %99 : vector<16x128xi1>, vector<16x128xf32>
    %101 = tpu.concatenate %100, %97 in 1 : vector<16x128xf32>, vector<16x128xf32> -> vector<16x256xf32>
    %102 = arith.truncf %101 : vector<16x256xf32> to vector<16x256xbf16>
    %c6 = arith.constant 6 : index
    %c0_51 = arith.constant 0 : index
    %c0_52 = arith.constant 0 : index
    %103 = vector.load %arg2[%c6, %c0_51, %c0_52] : memref<8x256x128xbf16, #tpu.memory_space<vmem>>, vector<1x256x128xbf16>
    %104 = vector.shape_cast %103 : vector<1x256x128xbf16> to vector<256x128xbf16>
    %cst_53 = arith.constant dense<0.000000e+00> : vector<16x128xf32>
    %105 = tpu.matmul %102, %104, %cst_53 {dimension_numbers = #tpu.dot_dimension_numbers<[1], [0], [0], [1], [0, 0, 1, 1], [], []>} : vector<16x256xbf16>, vector<256x128xbf16>, vector<16x128xf32> -> vector<16x128xf32>
    %c6_54 = arith.constant 6 : index
    %c0_55 = arith.constant 0 : index
    %106 = vector.load %arg3[%c6_54, %c0_55] : memref<8x128xf32, #tpu.memory_space<vmem>>, vector<1x128xf32>
    %107 = vector.broadcast %106 : vector<1x128xf32> to vector<16x128xf32>
    %108 = arith.addf %105, %107 : vector<16x128xf32>
    %cst_56 = arith.constant 0.000000e+00 : f32
    %109 = vector.broadcast %cst_56 : f32 to vector<16x128xf32>
    %110 = arith.maximumf %108, %109 : vector<16x128xf32>
    %c4_i32_57 = arith.constant 4 : i32
    %111 = tpu.dynamic_rotate %110 by %c4_i32_57 dim 0 : vector<16x128xf32>, i32 -> vector<16x128xf32>
    %cst_58 = arith.constant 0.000000e+00 : f32
    %112 = vector.broadcast %cst_58 : f32 to vector<16x128xf32>
    %113 = arith.select %22, %111, %112 : vector<16x128xi1>, vector<16x128xf32>
    %114 = tpu.concatenate %113, %110 in 1 : vector<16x128xf32>, vector<16x128xf32> -> vector<16x256xf32>
    %115 = arith.truncf %114 : vector<16x256xf32> to vector<16x256xbf16>
    %c7 = arith.constant 7 : index
    %c0_59 = arith.constant 0 : index
    %c0_60 = arith.constant 0 : index
    %116 = vector.load %arg2[%c7, %c0_59, %c0_60] : memref<8x256x128xbf16, #tpu.memory_space<vmem>>, vector<1x256x128xbf16>
    %117 = vector.shape_cast %116 : vector<1x256x128xbf16> to vector<256x128xbf16>
    %cst_61 = arith.constant dense<0.000000e+00> : vector<16x128xf32>
    %118 = tpu.matmul %115, %117, %cst_61 {dimension_numbers = #tpu.dot_dimension_numbers<[1], [0], [0], [1], [0, 0, 1, 1], [], []>} : vector<16x256xbf16>, vector<256x128xbf16>, vector<16x128xf32> -> vector<16x128xf32>
    %c7_62 = arith.constant 7 : index
    %c0_63 = arith.constant 0 : index
    %119 = vector.load %arg3[%c7_62, %c0_63] : memref<8x128xf32, #tpu.memory_space<vmem>>, vector<1x128xf32>
    %120 = vector.broadcast %119 : vector<1x128xf32> to vector<16x128xf32>
    %121 = arith.addf %118, %120 : vector<16x128xf32>
    %cst_64 = arith.constant 0.000000e+00 : f32
    %122 = vector.broadcast %cst_64 : f32 to vector<16x128xf32>
    %123 = arith.maximumf %121, %122 : vector<16x128xf32>
    %124 = arith.addf %123, %97 : vector<16x128xf32>
    %cst_65 = arith.constant 0.000000e+00 : f32
    %125 = vector.broadcast %cst_65 : f32 to vector<16x128xf32>
    %126 = arith.maximumf %124, %125 : vector<16x128xf32>
    %c0_66 = arith.constant 0 : index
    %c0_67 = arith.constant 0 : index
    %127 = vector.load %arg4[%c0_66, %c0_67] : memref<16x128xf32, #tpu.memory_space<vmem>>, vector<16x128xf32>
    tpu.vector_store %arg4[%c0_66, %c0_67], %126 {strides = array<i32>} : memref<16x128xf32, #tpu.memory_space<vmem>>, vector<16x128xf32>,
    return
  }
  func.func @transform_0(%arg0: i32) -> (i32, i32) {
    %c0_i32 = arith.constant 0 : i32
    %c0_i32_0 = arith.constant 0 : i32
    return %arg0, %c0_i32 : i32, i32
  }
  func.func @transform_1(%arg0: i32) -> (i32, i32, i32) {
    %c0_i32 = arith.constant 0 : i32
    %c0_i32_0 = arith.constant 0 : i32
    %c0_i32_1 = arith.constant 0 : i32
    %c0_i32_2 = arith.constant 0 : i32
    return %c0_i32, %c0_i32_0, %c0_i32_1 : i32, i32, i32
  }
  func.func @transform_2(%arg0: i32) -> (i32, i32) {
    %c0_i32 = arith.constant 0 : i32
    %c0_i32_0 = arith.constant 0 : i32
    %c0_i32_1 = arith.constant 0 : i32
    return %c0_i32, %c0_i32_0 : i32, i32
  }
  func.func @transform_3(%arg0: i32) -> (i32, i32) {
    %c0_i32 = arith.constant 0 : i32
    %c0_i32_0 = arith.constant 0 : i32
    return %arg0, %c0_i32 : i32, i32
  }
}

</mosaic_0001>

<llo_original>
// kernel: tpu_custom_call.1
$region0: #{tpu_custom_call.1}
  #allocation0 [shape = 'u32[]', space=smem, size = 0x4, offset = 0x4, fixed_abs, tag = 'smem constant byte address 0x4 - core index']
  #allocation1 [shape = 'u32[144,128]{1,0:T(1,128)}', space=vmem, size = 0x12000, scoped, tag = 'internal scratch']
  %s0 = inlined_call_operand.hbm [shape: f32[32,128], index: 0, kind: input, shape index: {}]
  %s1 = inlined_call_operand.hbm [shape: bf16[8,256,128], index: 1, kind: input, shape index: {}]
  %s2 = inlined_call_operand.hbm [shape: f32[8,128], index: 2, kind: input, shape index: {}]
  %s3 = inlined_call_operand.hbm [shape: f32[32,128], index: 3, kind: output, shape index: {}]
  %s4 = sld [smem:[#allocation0]]
  $region57: #{tpu_custom_call.1} parent=0
    _
  %s6 = ssub.s32 1, %s4
  %s7 = scalar_select 0, %s6, %s4
  $region1: #{tpu_custom_call.1} parent=0
    #allocation2 [shape = 'u8[16384]{0}', space=vmem, size = 0x4000, scoped, tag = 'input window, operand 0']
    #allocation3 [shape = 's32[2]{0}', space=sflag, size = 0x8, scoped, tag = 'scoped memory for tpu_custom_call.1']
    #allocation4 [shape = 's32[2]{0}', space=sflag, size = 0x8, scoped, tag = 'scoped memory for tpu_custom_call.1']
    #allocation5 [shape = 'u8[524288]{0}', space=vmem, size = 0x80000, scoped, tag = 'input window, operand 1, single buffered']
    #allocation6 [shape = 's32[1]{0}', space=sflag, size = 0x4, scoped, tag = 'scoped memory for tpu_custom_call.1']
    #allocation7 [shape = 'u8[4096]{0}', space=vmem, size = 0x1000, scoped, tag = 'input window, operand 2, single buffered']
    #allocation8 [shape = 'u8[16384]{0}', space=vmem, size = 0x4000, scoped, tag = 'output window, operand 0']
    %8 = vsyncpa [#allocation3], 0
    %s9 = scalar_lea.sflag [#allocation3], 1
    %10 = vsyncpa %s9, 0
    %11 = vsyncpa [#allocation6], 0
    %12 = vsyncpa [#allocation4], 0
    %s13 = scalar_lea.sflag [#allocation4], 1
    %14 = vsyncpa %s13, 0
    loop: start=0, step=1, limit=4
    $region2: #{tpu_custom_call.1} parent=1 // loop_pre_header
      _
    $region3: #{tpu_custom_call.1} parent=1 // loop_header
      %s16 = sphi 0, %s20
      %p17 = scmp.ge.s32.totalorder %s16, 4
      %s26 = sphi 0, %s28
      %s29 = sphi 0, %s26
      %s30 = sphi 0, %s29
      %s46 = sphi 0, %s30
      %s50 = sphi 0, %s50
      %s52 = sphi 0, %s50
      %s53 = sphi 0, %s52
      %s67 = sphi 0, %s53
      %s71 = sphi 0, %s71
      %s73 = sphi 0, %s71
      %s74 = sphi 0, %s73
      %s88 = sphi 0, %s74
      %s94 = sphi 0, %s96
      %s97 = sphi 0, %s94
      %s98 = sphi 0, %s97
      %s114 = sphi 0, %s98
    $region4: #{tpu_custom_call.1} parent=1 // loop_header_branch
      %19 = sbr.rel (%p17) target = $region8
    $region5: #{tpu_custom_call.1} parent=1 // loop_body
      %s21 = ssub.s32 %s16, 1
      %s22 = ssub.s32 %s16, 2
      %s23 = sadd.s32 %s16, 1
      %s24 = ssub.s32 %s16, %s23
      %p25 = scmp.eq.s32.totalorder %s24, 0
      %s27 = sadd.s32 %s26, 1
      %s28 = scalar_select %p25, %s26, %s27
      %p31 = pneg %p25
      %p32 = scmp.eq.s32.totalorder %s16, 1
      %p33 = por %p31, %p32
      %p34 = scmp.ne.s32.totalorder %s26, %s29
      %p35 = scmp.eq.s32.totalorder %s16, 0
      %p36 = por %p34, %p35
      %p37 = scmp.ne.s32.totalorder %s26, %s29
      %p38 = scmp.eq.s32.totalorder %s21, 1
      %p39 = por %p37, %p38
      %p40 = scmp.ne.s32.totalorder %s29, %s30
      %p41 = scmp.eq.s32.totalorder %s21, 0
      %p42 = por %p40, %p41
      %p43 = scmp.ne.s32.totalorder %s29, %s30
      %p44 = scmp.eq.s32.totalorder %s22, 1
      %p45 = por %p43, %p44
      %p47 = scmp.ne.s32.totalorder %s30, %s46
      %p48 = scmp.eq.s32.totalorder %s22, 0
      %p49 = por %p47, %p48
      %s51 = sadd.s32 %s50, 1
      %p54 = scmp.eq.s32.totalorder %s16, 1
      %p55 = scmp.ne.s32.totalorder %s50, %s52
      %p56 = scmp.eq.s32.totalorder %s16, 0
      %p57 = por %p55, %p56
      %p58 = scmp.ne.s32.totalorder %s50, %s52
      %p59 = scmp.eq.s32.totalorder %s21, 1
      %p60 = por %p58, %p59
      %p61 = scmp.ne.s32.totalorder %s52, %s53
      %p62 = scmp.eq.s32.totalorder %s21, 0
      %p63 = por %p61, %p62
      %p64 = scmp.ne.s32.totalorder %s52, %s53
      %p65 = scmp.eq.s32.totalorder %s22, 1
      %p66 = por %p64, %p65
      %p68 = scmp.ne.s32.totalorder %s53, %s67
      %p69 = scmp.eq.s32.totalorder %s22, 0
      %p70 = por %p68, %p69
      %s72 = sadd.s32 %s71, 1
      %p75 = scmp.eq.s32.totalorder %s16, 1
      %p76 = scmp.ne.s32.totalorder %s71, %s73
      %p77 = scmp.eq.s32.totalorder %s16, 0
      %p78 = por %p76, %p77
      %p79 = scmp.ne.s32.totalorder %s71, %s73
      %p80 = scmp.eq.s32.totalorder %s21, 1
      %p81 = por %p79, %p80
      %p82 = scmp.ne.s32.totalorder %s73, %s74
      %p83 = scmp.eq.s32.totalorder %s21, 0
      %p84 = por %p82, %p83
      %p85 = scmp.ne.s32.totalorder %s73, %s74
      %p86 = scmp.eq.s32.totalorder %s22, 1
      %p87 = por %p85, %p86
      %p89 = scmp.ne.s32.totalorder %s74, %s88
      %p90 = scmp.eq.s32.totalorder %s22, 0
      %p91 = por %p89, %p90
      %s92 = ssub.s32 %s16, %s23
      %p93 = scmp.eq.s32.totalorder %s92, 0
      %s95 = sadd.s32 %s94, 1
      %s96 = scalar_select %p93, %s94, %s95
      %p99 = pneg %p93
      %p100 = scmp.eq.s32.totalorder %s16, 1
      %p101 = por %p99, %p100
      %p102 = scmp.ne.s32.totalorder %s94, %s97
      %p103 = scmp.eq.s32.totalorder %s16, 0
      %p104 = por %p102, %p103
      %p105 = scmp.ne.s32.totalorder %s94, %s97
      %p106 = scmp.eq.s32.totalorder %s21, 1
      %p107 = por %p105, %p106
      %p108 = scmp.ne.s32.totalorder %s97, %s98
      %p109 = scmp.eq.s32.totalorder %s21, 0
      %p110 = por %p108, %p109
      %p111 = scmp.ne.s32.totalorder %s97, %s98
      %p112 = scmp.eq.s32.totalorder %s22, 1
      %p113 = por %p111, %p112
      %p115 = scmp.ne.s32.totalorder %s98, %s114
      %p116 = scmp.eq.s32.totalorder %s22, 0
      %p117 = por %p115, %p116
      %p118 = scmp.le.s32.totalorder 1, %s16
      %p119 = scmp.lt.s32.totalorder %s16, 3
      %p120 = pnand %p118, %p119
      %p121 = pneg %p120
      // Predicated region
      $region9: #{tpu_custom_call.1} parent=5 // pred_check
        _
      $region10: #{tpu_custom_call.1} parent=5 // pred_check_branch
        %123 = sbr.rel (%p120) target = $region12
      $region11: #{tpu_custom_call.1} parent=5 // pred_region
        %s124 = ssub.s32 %s16, 1
        // Predicated region
        $region13: #{tpu_custom_call.1} parent=11 // pred_check
          %p125 = pneg %p63
        $region14: #{tpu_custom_call.1} parent=11 // pred_check_branch
          %127 = sbr.rel (%p125) target = $region16
        $region15: #{tpu_custom_call.1} parent=11 // pred_region
          %s129 = ssub.s32 16384, 16384
          %130 = vsyncadd [#allocation6], %s129
          %s131 = sshll.u32 [#allocation5], 4
          %s132 = int_to_ptr.vmem [resolvable:$true] %s131
          %137 = dma.hbm_to_vmem [thread:$0]  %s1, 16384, %s132, [#allocation6], 64, 64, 4
        $region16: #{tpu_custom_call.1} parent=11 // pred_fallthru
          _
        // Predicated region
        $region17: #{tpu_custom_call.1} parent=11 // pred_check
          %p138 = pneg %p84
        $region18: #{tpu_custom_call.1} parent=11 // pred_check_branch
          %140 = sbr.rel (%p138) target = $region20
        $region19: #{tpu_custom_call.1} parent=11 // pred_region
          %s142 = ssub.s32 128, 128
          %143 = vsyncadd [#allocation6], %s142
          %s145 = sshll.u32 [#allocation7], 4
          %s146 = int_to_ptr.vmem [resolvable:$true] %s145
          %148 = dma.hbm_to_vmem [thread:$0]  %s2, 128, %s146, [#allocation6]
        $region20: #{tpu_custom_call.1} parent=11 // pred_fallthru
          _
      $region12: #{tpu_custom_call.1} parent=5 // pred_fallthru
        _
      %p149 = scmp.lt.s32.totalorder %s16, 2
      // Predicated region
      $region21: #{tpu_custom_call.1} parent=5 // pred_check
        %p150 = pneg %p149
      $region22: #{tpu_custom_call.1} parent=5 // pred_check_branch
        %152 = sbr.rel (%p150) target = $region24
      $region23: #{tpu_custom_call.1} parent=5 // pred_region
        // Predicated region
        $region25: #{tpu_custom_call.1} parent=23 // pred_check
          %p153 = pneg %p36
        $region26: #{tpu_custom_call.1} parent=23 // pred_check_branch
          %155 = sbr.rel (%p153) target = $region28
        $region27: #{tpu_custom_call.1} parent=23 // pred_region
          %s156 = sand.u32 %s26, 1
          %s157 = scalar_lea.sflag [#allocation3], %s156
          %s158 = sand.u32 %s26, 1
          %s159 = smul.addr %s158, 16
          %s160 = scalar_lea.vmem [#allocation2], %s159
          %s161 = smul.u32 2, %s16
          %s163 = ssub.s32 256, 256
          %164 = vsyncadd %s157, %s163
          %s165 = smul.addr %s161, 128
          %s166 = scalar_lea.hbm %s0, %s165
          %s167 = sshll.u32 %s160, 4
          %s168 = int_to_ptr.vmem [resolvable:$true] %s167
          %173 = dma.hbm_to_vmem [thread:$0]  %s166, 256, %s168, %s157, 128, 128, 8
        $region28: #{tpu_custom_call.1} parent=23 // pred_fallthru
          _
      $region24: #{tpu_custom_call.1} parent=5 // pred_fallthru
        _
      %p174 = scmp.le.s32.totalorder 1, %s16
      %p175 = scmp.lt.s32.totalorder %s16, 3
      %p176 = pnand %p174, %p175
      %p177 = pneg %p176
      // Predicated region
      $region29: #{tpu_custom_call.1} parent=5 // pred_check
        _
      $region30: #{tpu_custom_call.1} parent=5 // pred_check_branch
        %179 = sbr.rel (%p176) target = $region32
      $region31: #{tpu_custom_call.1} parent=5 // pred_region
        %s180 = ssub.s32 %s16, 1
        %s181 = sand.u32 %s29, 1
        %s182 = scalar_lea.sflag [#allocation3], %s181
        %s183 = sand.u32 %s29, 1
        %s184 = smul.addr %s183, 16
        %s185 = scalar_lea.vmem [#allocation2], %s184
        // Predicated region
        $region33: #{tpu_custom_call.1} parent=31 // pred_check
          %p186 = pneg %p42
        $region34: #{tpu_custom_call.1} parent=31 // pred_check_branch
          %188 = sbr.rel (%p186) target = $region36
        $region35: #{tpu_custom_call.1} parent=31 // pred_region
          %189 = dma.done %s182, 256
        $region36: #{tpu_custom_call.1} parent=31 // pred_fallthru
          _
        // Predicated region
        $region37: #{tpu_custom_call.1} parent=31 // pred_check
          %p190 = pneg %p63
        $region38: #{tpu_custom_call.1} parent=31 // pred_check_branch
          %192 = sbr.rel (%p190) target = $region40
        $region39: #{tpu_custom_call.1} parent=31 // pred_region
          %193 = dma.done [#allocation6], 16384
        $region40: #{tpu_custom_call.1} parent=31 // pred_fallthru
          _
        // Predicated region
        $region41: #{tpu_custom_call.1} parent=31 // pred_check
          %p194 = pneg %p84
        $region42: #{tpu_custom_call.1} parent=31 // pred_check_branch
          %196 = sbr.rel (%p194) target = $region44
        $region43: #{tpu_custom_call.1} parent=31 // pred_region
          %197 = dma.done [#allocation6], 128
        $region44: #{tpu_custom_call.1} parent=31 // pred_fallthru
          _
        %s198 = sand.u32 %s29, 1
        %s199 = scalar_lea.sflag [#allocation3], %s198
        %s200 = sand.u32 %s29, 1
        %s201 = smul.addr %s200, 16
        %s202 = scalar_lea.vmem [#allocation2], %s201
        %p203 = pneg %p42
        %p204 = pneg %p39
        %p205 = pneg %p63
        %p206 = pneg %p60
        %p207 = pneg %p84
        %p208 = pneg %p81
        %p209 = pneg %p110
        %p210 = pneg %p107
        %s211 = sand.u32 %s97, 1
        %s212 = scalar_lea.sflag [#allocation4], %s211
        %s213 = sand.u32 %s97, 1
        %s214 = smul.addr %s213, 16
        %s215 = scalar_lea.vmem [#allocation8], %s214
        %s216 = smul.u32 2, %s21
        %s217 = smul.u32 2, %s21
        %v219 = vlaneseq
        %v220 = vshrl.u32 %v219, 7
        %v221 = vadd.s32 %v220, 8
        %vm222 = vcmp.lt.s32.totalorder %v220, 0
        %v223 = vsub.s32 0, %v220
        %v224 = vsel %vm222, %v223, %v220
        %v225 = vshrl.u32 %v224, 4
        %v226 = vand.u32 %v224, 15
        %v227 = vsub.s32 0, %v226
        %v228 = vsel %vm222, %v227, %v226
        %vm229 = vcmp.lt.s32.totalorder %v221, 0
        %v230 = vsub.s32 0, %v221
        %v231 = vsel %vm229, %v230, %v221
        %v232 = vshrl.u32 %v231, 4
        %v233 = vand.u32 %v231, 15
        %v234 = vsub.s32 0, %v233
        %v235 = vsel %vm229, %v234, %v233
        %vm236 = vcmp.ne.s32.totalorder %v228, 0
        %vm237 = vcmp.ne.s32.totalorder %v235, 0
        %vm238 = vcmp.lt.s32.totalorder %v228, 0
        %vm239 = vcmp.lt.s32.totalorder %v235, 0
        %vm240 = vmand %vm238, %vm236
        %vm241 = vmand %vm239, %vm237
        %v242 = vadd.s32 %v228, 16
        %v243 = vadd.s32 %v235, 16
        %v244 = vsel %vm240, %v242, %v228
        %v245 = vsel %vm241, %v243, %v235
        %vm246 = vcmp.ge.s32.totalorder %v244, 1
        %vm247 = vcmp.ge.s32.totalorder %v245, 1
        %vm248 = vcmp.ge.s32.totalorder %v244, 2
        %vm249 = vcmp.ge.s32.totalorder %v245, 2
        %vm250 = vcmp.ge.s32.totalorder %v244, 4
        %vm251 = vcmp.ge.s32.totalorder %v245, 4
        %v252 = vld [vmem:[%s185] sm:$0xff]
        %v253 = vld [vmem:[%s185 + $0x8] sm:$0xff]
        %v254 = vrot.slane %v252, 7
        %v255 = vrot.slane %v253, 7
        %vm256 = vcmp.lt.s32.totalorder %v220, 1
        %v257 = vsel %vm256, %v254, %v255
        %v258 = vsel %vm256, %v255, %v254
        %v259 = vsel %vm246, %v258, 0.0
        %v260 = vsel %vm247, %v257, 0.0
        %v261 = vpack.c.bf16 %v260, %v259
        %v262 = vpack.c.bf16 %v253, %v252
        %v263 = vld [vmem:[#allocation5] sm:$0xf]
        %v264 = vld [vmem:[#allocation5 + $0x4] sm:$0xf]
        %v265 = vld [vmem:[#allocation5 + $0x8] sm:$0xf]
        %v266 = vld [vmem:[#allocation5 + $0xc] sm:$0xf]
        %v267 = vld [vmem:[#allocation5 + $0x10] sm:$0xf]
        %v268 = vld [vmem:[#allocation5 + $0x14] sm:$0xf]
        %v269 = vld [vmem:[#allocation5 + $0x18] sm:$0xf]
        %v270 = vld [vmem:[#allocation5 + $0x1c] sm:$0xf]
        %v271 = vld [vmem:[#allocation5 + $0x20] sm:$0xf]
        %v272 = vld [vmem:[#allocation5 + $0x24] sm:$0xf]
        %v273 = vld [vmem:[#allocation5 + $0x28] sm:$0xf]
        %v274 = vld [vmem:[#allocation5 + $0x2c] sm:$0xf]
        %v275 = vld [vmem:[#allocation5 + $0x30] sm:$0xf]
        %v276 = vld [vmem:[#allocation5 + $0x34] sm:$0xf]
        %v277 = vld [vmem:[#allocation5 + $0x38] sm:$0xf]
        %v278 = vld [vmem:[#allocation5 + $0x3c] sm:$0xf]
        %v279 = vld [vmem:[#allocation5 + $0x40] sm:$0xf]
        %v280 = vld [vmem:[#allocation5 + $0x44] sm:$0xf]
        %v281 = vld [vmem:[#allocation5 + $0x48] sm:$0xf]
        %v282 = vld [vmem:[#allocation5 + $0x4c] sm:$0xf]
        %v283 = vld [vmem:[#allocation5 + $0x50] sm:$0xf]
        %v284 = vld [vmem:[#allocation5 + $0x54] sm:$0xf]
        %v285 = vld [vmem:[#allocation5 + $0x58] sm:$0xf]
        %v286 = vld [vmem:[#allocation5 + $0x5c] sm:$0xf]
        %v287 = vld [vmem:[#allocation5 + $0x60] sm:$0xf]
        %v288 = vld [vmem:[#allocation5 + $0x64] sm:$0xf]
        %v289 = vld [vmem:[#allocation5 + $0x68] sm:$0xf]
        %v290 = vld [vmem:[#allocation5 + $0x6c] sm:$0xf]
        %v291 = vld [vmem:[#allocation5 + $0x70] sm:$0xf]
        %v292 = vld [vmem:[#allocation5 + $0x74] sm:$0xf]
        %v293 = vld [vmem:[#allocation5 + $0x78] sm:$0xf]
        %v294 = vld [vmem:[#allocation5 + $0x7c] sm:$0xf]
        %v295 = vld [vmem:[#allocation7] sm:$0x1]
        %v296 = vlaneseq
        %v297 = vshrl.u32 %v296, 7
        %v298 = vsub.s32 0, %v297
        %v299 = vrot.slane %v295, %v298
        %v332 = vunpack.c.l.b16 %v263
        %v333 = vunpack.c.l.b16 %v264
        %v334 = vunpack.c.l.b16 %v265
        %v335 = vunpack.c.l.b16 %v266
        %v336 = vunpack.c.l.b16 %v267
        %v337 = vunpack.c.l.b16 %v268
        %v338 = vunpack.c.l.b16 %v269
        %v339 = vunpack.c.l.b16 %v270
        %v340 = vunpack.c.l.b16 %v271
        %v341 = vunpack.c.l.b16 %v272
        %v342 = vunpack.c.l.b16 %v273
        %v343 = vunpack.c.l.b16 %v274
        %v344 = vunpack.c.l.b16 %v275
        %v345 = vunpack.c.l.b16 %v276
        %v346 = vunpack.c.l.b16 %v277
        %v347 = vunpack.c.l.b16 %v278
        %v348 = vunpack.c.l.b16 %v279
        %v349 = vunpack.c.l.b16 %v280
        %v350 = vunpack.c.l.b16 %v281
        %v351 = vunpack.c.l.b16 %v282
        %v352 = vunpack.c.l.b16 %v283
        %v353 = vunpack.c.l.b16 %v284
        %v354 = vunpack.c.l.b16 %v285
        %v355 = vunpack.c.l.b16 %v286
        %v356 = vunpack.c.l.b16 %v287
        %v357 = vunpack.c.l.b16 %v288
        %v358 = vunpack.c.l.b16 %v289
        %v359 = vunpack.c.l.b16 %v290
        %v360 = vunpack.c.l.b16 %v291
        %v361 = vunpack.c.l.b16 %v292
        %v362 = vunpack.c.l.b16 %v293
        %v363 = vunpack.c.l.b16 %v294
        %v364 = vpack.c.b16 %v333, %v332
        %v365 = vpack.c.b16 %v335, %v334
        %v366 = vpack.c.b16 %v337, %v336
        %v367 = vpack.c.b16 %v339, %v338
        %v368 = vpack.c.b16 %v341, %v340
        %v369 = vpack.c.b16 %v343, %v342
        %v370 = vpack.c.b16 %v345, %v344
        %v371 = vpack.c.b16 %v347, %v346
        %v372 = vpack.c.b16 %v349, %v348
        %v373 = vpack.c.b16 %v351, %v350
        %v374 = vpack.c.b16 %v353, %v352
        %v375 = vpack.c.b16 %v355, %v354
        %v376 = vpack.c.b16 %v357, %v356
        %v377 = vpack.c.b16 %v359, %v358
        %v378 = vpack.c.b16 %v361, %v360
        %v379 = vpack.c.b16 %v363, %v362
        %396 = vmatprep.subr.bf16.mxu0 0
        %397 = vmatpush1.bf16.msra.mxu0 %v364
        %398 = vmatprep.subr.bf16.mxu0 0
        %399 = vmatpush1.bf16.msra.mxu0 %v365
        %400 = vmatprep.subr.bf16.mxu0 0
        %401 = vmatpush1.bf16.msra.mxu0 %v366
        %402 = vmatprep.subr.bf16.mxu0 0
        %403 = vmatpush1.bf16.msra.mxu0 %v367
        %404 = vmatprep.subr.bf16.mxu0 0
        %405 = vmatpush1.bf16.msra.mxu0 %v368
        %406 = vmatprep.subr.bf16.mxu0 0
        %407 = vmatpush1.bf16.msra.mxu0 %v369
        %408 = vmatprep.subr.bf16.mxu0 0
        %409 = vmatpush1.bf16.msra.mxu0 %v370
        %410 = vmatprep.subr.bf16.mxu0 0
        %411 = vmatpush1.bf16.msra.mxu0 %v371
        %412 = vmatprep.subr.bf16.mxu0 0
        %413 = vmatpush1.bf16.msra.mxu0 %v372
        %414 = vmatprep.subr.bf16.mxu0 0
        %415 = vmatpush1.bf16.msra.mxu0 %v373
        %416 = vmatprep.subr.bf16.mxu0 0
        %417 = vmatpush1.bf16.msra.mxu0 %v374
        %418 = vmatprep.subr.bf16.mxu0 0
        %419 = vmatpush1.bf16.msra.mxu0 %v375
        %420 = vmatprep.subr.bf16.mxu0 0
        %421 = vmatpush1.bf16.msra.mxu0 %v376
        %422 = vmatprep.subr.bf16.mxu0 0
        %423 = vmatpush1.bf16.msra.mxu0 %v377
        %424 = vmatprep.subr.bf16.mxu0 0
        %425 = vmatpush1.bf16.msra.mxu0 %v378
        %426 = vmatprep.subr.bf16.mxu0 0
        %427 = vmatpush1.bf16.msra.mxu0 %v379
        %428 = vmatprep.mubr.bf16.mxu0 %v262
        %429 = vmatmul.mubr.bf16.gmra.mrb[0].mxu0 %v261
        %v430 = vpop.f32.mrb[0].mxu0
        %v431 = vadd.f32 %v299, %v430
        %v432 = vpop.f32.mrb[0].mxu0
        %v433 = vpop.f32.mrb[0].mxu0
        %v434 = vadd.f32 %v299, %v433
        %v435 = vpop.f32.mrb[0].mxu0
        %436 = vdwg.mxu0
        %v437 = vmax.f32 %v431, 0.0
        %v438 = vmax.f32 %v434, 0.0
        %v439 = vrot.slane %v437, 7
        %v440 = vrot.slane %v438, 7
        %v441 = vsel %vm256, %v439, %v440
        %v442 = vsel %vm256, %v440, %v439
        %v443 = vsel %vm246, %v442, 0.0
        %v444 = vsel %vm247, %v441, 0.0
        %v445 = vpack.c.bf16 %v444, %v443
        %v446 = vpack.c.bf16 %v438, %v437
        %s447 = scalar_lea.vmem [#allocation5], 128
        %v448 = vld [vmem:[%s447] sm:$0xf]
        %v449 = vld [vmem:[%s447 + $0x4] sm:$0xf]
        %v450 = vld [vmem:[%s447 + $0x8] sm:$0xf]
        %v451 = vld [vmem:[%s447 + $0xc] sm:$0xf]
        %v452 = vld [vmem:[%s447 + $0x10] sm:$0xf]
        %v453 = vld [vmem:[%s447 + $0x14] sm:$0xf]
        %v454 = vld [vmem:[%s447 + $0x18] sm:$0xf]
        %v455 = vld [vmem:[%s447 + $0x1c] sm:$0xf]
        %v456 = vld [vmem:[%s447 + $0x20] sm:$0xf]
        %v457 = vld [vmem:[%s447 + $0x24] sm:$0xf]
        %v458 = vld [vmem:[%s447 + $0x28] sm:$0xf]
        %v459 = vld [vmem:[%s447 + $0x2c] sm:$0xf]
        %v460 = vld [vmem:[%s447 + $0x30] sm:$0xf]
        %v461 = vld [vmem:[%s447 + $0x34] sm:$0xf]
        %v462 = vld [vmem:[%s447 + $0x38] sm:$0xf]
        %v463 = vld [vmem:[%s447 + $0x3c] sm:$0xf]
        %v464 = vld [vmem:[%s447 + $0x40] sm:$0xf]
        %v465 = vld [vmem:[%s447 + $0x44] sm:$0xf]
        %v466 = vld [vmem:[%s447 + $0x48] sm:$0xf]
        %v467 = vld [vmem:[%s447 + $0x4c] sm:$0xf]
        %v468 = vld [vmem:[%s447 + $0x50] sm:$0xf]
        %v469 = vld [vmem:[%s447 + $0x54] sm:$0xf]
        %v470 = vld [vmem:[%s447 + $0x58] sm:$0xf]
        %v471 = vld [vmem:[%s447 + $0x5c] sm:$0xf]
        %v472 = vld [vmem:[%s447 + $0x60] sm:$0xf]
        %v473 = vld [vmem:[%s447 + $0x64] sm:$0xf]
        %v474 = vld [vmem:[%s447 + $0x68] sm:$0xf]
        %v475 = vld [vmem:[%s447 + $0x6c] sm:$0xf]
        %v476 = vld [vmem:[%s447 + $0x70] sm:$0xf]
        %v477 = vld [vmem:[%s447 + $0x74] sm:$0xf]
        %v478 = vld [vmem:[%s447 + $0x78] sm:$0xf]
        %v479 = vld [vmem:[%s447 + $0x7c] sm:$0xf]
        %v480 = vld [vmem:[#allocation7 + $0x1] sm:$0x1]
        %v481 = vlaneseq
        %v482 = vshrl.u32 %v481, 7
        %v483 = vsub.s32 0, %v482
        %v484 = vrot.slane %v480, %v483
        %v517 = vunpack.c.l.b16 %v448
        %v518 = vunpack.c.l.b16 %v449
        %v519 = vunpack.c.l.b16 %v450
        %v520 = vunpack.c.l.b16 %v451
        %v521 = vunpack.c.l.b16 %v452
        %v522 = vunpack.c.l.b16 %v453
        %v523 = vunpack.c.l.b16 %v454
        %v524 = vunpack.c.l.b16 %v455
        %v525 = vunpack.c.l.b16 %v456
        %v526 = vunpack.c.l.b16 %v457
        %v527 = vunpack.c.l.b16 %v458
        %v528 = vunpack.c.l.b16 %v459
        %v529 = vunpack.c.l.b16 %v460
        %v530 = vunpack.c.l.b16 %v461
        %v531 = vunpack.c.l.b16 %v462
        %v532 = vunpack.c.l.b16 %v463
        %v533 = vunpack.c.l.b16 %v464
        %v534 = vunpack.c.l.b16 %v465
        %v535 = vunpack.c.l.b16 %v466
        %v536 = vunpack.c.l.b16 %v467
        %v537 = vunpack.c.l.b16 %v468
        %v538 = vunpack.c.l.b16 %v469
        %v539 = vunpack.c.l.b16 %v470
        %v540 = vunpack.c.l.b16 %v471
        %v541 = vunpack.c.l.b16 %v472
        %v542 = vunpack.c.l.b16 %v473
        %v543 = vunpack.c.l.b16 %v474
        %v544 = vunpack.c.l.b16 %v475
        %v545 = vunpack.c.l.b16 %v476
        %v546 = vunpack.c.l.b16 %v477
        %v547 = vunpack.c.l.b16 %v478
        %v548 = vunpack.c.l.b16 %v479
        %v549 = vpack.c.b16 %v518, %v517
        %v550 = vpack.c.b16 %v520, %v519
        %v551 = vpack.c.b16 %v522, %v521
        %v552 = vpack.c.b16 %v524, %v523
        %v553 = vpack.c.b16 %v526, %v525
        %v554 = vpack.c.b16 %v528, %v527
        %v555 = vpack.c.b16 %v530, %v529
        %v556 = vpack.c.b16 %v532, %v531
        %v557 = vpack.c.b16 %v534, %v533
        %v558 = vpack.c.b16 %v536, %v535
        %v559 = vpack.c.b16 %v538, %v537
        %v560 = vpack.c.b16 %v540, %v539
        %v561 = vpack.c.b16 %v542, %v541
        %v562 = vpack.c.b16 %v544, %v543
        %v563 = vpack.c.b16 %v546, %v545
        %v564 = vpack.c.b16 %v548, %v547
        %581 = vmatprep.subr.bf16.mxu0 0
        %582 = vmatpush1.bf16.msra.mxu0 %v549
        %583 = vmatprep.subr.bf16.mxu0 0
        %584 = vmatpush1.bf16.msra.mxu0 %v550
        %585 = vmatprep.subr.bf16.mxu0 0
        %586 = vmatpush1.bf16.msra.mxu0 %v551
        %587 = vmatprep.subr.bf16.mxu0 0
        %588 = vmatpush1.bf16.msra.mxu0 %v552
        %589 = vmatprep.subr.bf16.mxu0 0
        %590 = vmatpush1.bf16.msra.mxu0 %v553
        %591 = vmatprep.subr.bf16.mxu0 0
        %592 = vmatpush1.bf16.msra.mxu0 %v554
        %593 = vmatprep.subr.bf16.mxu0 0
        %594 = vmatpush1.bf16.msra.mxu0 %v555
        %595 = vmatprep.subr.bf16.mxu0 0
        %596 = vmatpush1.bf16.msra.mxu0 %v556
        %597 = vmatprep.subr.bf16.mxu0 0
        %598 = vmatpush1.bf16.msra.mxu0 %v557
        %599 = vmatprep.subr.bf16.mxu0 0
        %600 = vmatpush1.bf16.msra.mxu0 %v558
        %601 = vmatprep.subr.bf16.mxu0 0
        %602 = vmatpush1.bf16.msra.mxu0 %v559
        %603 = vmatprep.subr.bf16.mxu0 0
        %604 = vmatpush1.bf16.msra.mxu0 %v560
        %605 = vmatprep.subr.bf16.mxu0 0
        %606 = vmatpush1.bf16.msra.mxu0 %v561
        %607 = vmatprep.subr.bf16.mxu0 0
        %608 = vmatpush1.bf16.msra.mxu0 %v562
        %609 = vmatprep.subr.bf16.mxu0 0
        %610 = vmatpush1.bf16.msra.mxu0 %v563
        %611 = vmatprep.subr.bf16.mxu0 0
        %612 = vmatpush1.bf16.msra.mxu0 %v564
        %613 = vmatprep.mubr.bf16.mxu0 %v446
        %614 = vmatmul.mubr.bf16.gmra.mrb[0].mxu0 %v445
        %v615 = vpop.f32.mrb[0].mxu0
        %v616 = vadd.f32 %v484, %v615
        %v617 = vpop.f32.mrb[0].mxu0
        %v618 = vpop.f32.mrb[0].mxu0
        %v619 = vadd.f32 %v484, %v618
        %v620 = vpop.f32.mrb[0].mxu0
        %621 = vdwg.mxu0
        %v622 = vmax.f32 %v616, 0.0
        %v623 = vmax.f32 %v619, 0.0
        %s624 = scalar_lea.vmem [#allocation5], 256
        %v625 = vld [vmem:[%s624] sm:$0xf]
        %v626 = vld [vmem:[%s624 + $0x4] sm:$0xf]
        %v627 = vld [vmem:[%s624 + $0x8] sm:$0xf]
        %v628 = vld [vmem:[%s624 + $0xc] sm:$0xf]
        %v629 = vld [vmem:[%s624 + $0x10] sm:$0xf]
        %v630 = vld [vmem:[%s624 + $0x14] sm:$0xf]
        %v631 = vld [vmem:[%s624 + $0x18] sm:$0xf]
        %v632 = vld [vmem:[%s624 + $0x1c] sm:$0xf]
        %v633 = vld [vmem:[%s624 + $0x20] sm:$0xf]
        %v634 = vld [vmem:[%s624 + $0x24] sm:$0xf]
        %v635 = vld [vmem:[%s624 + $0x28] sm:$0xf]
        %v636 = vld [vmem:[%s624 + $0x2c] sm:$0xf]
        %v637 = vld [vmem:[%s624 + $0x30] sm:$0xf]
        %v638 = vld [vmem:[%s624 + $0x34] sm:$0xf]
        %v639 = vld [vmem:[%s624 + $0x38] sm:$0xf]
        %v640 = vld [vmem:[%s624 + $0x3c] sm:$0xf]
        %v641 = vld [vmem:[#allocation7 + $0x2] sm:$0x1]
        %v642 = vlaneseq
        %v643 = vshrl.u32 %v642, 7
        %v644 = vsub.s32 0, %v643
        %v645 = vrot.slane %v641, %v644
        %v662 = vunpack.c.l.b16 %v625
        %v663 = vunpack.c.l.b16 %v626
        %v664 = vunpack.c.l.b16 %v627
        %v665 = vunpack.c.l.b16 %v628
        %v666 = vunpack.c.l.b16 %v629
        %v667 = vunpack.c.l.b16 %v630
        %v668 = vunpack.c.l.b16 %v631
        %v669 = vunpack.c.l.b16 %v632
        %v670 = vunpack.c.l.b16 %v633
        %v671 = vunpack.c.l.b16 %v634
        %v672 = vunpack.c.l.b16 %v635
        %v673 = vunpack.c.l.b16 %v636
        %v674 = vunpack.c.l.b16 %v637
        %v675 = vunpack.c.l.b16 %v638
        %v676 = vunpack.c.l.b16 %v639
        %v677 = vunpack.c.l.b16 %v640
        %v678 = vpack.c.b16 %v663, %v662
        %v679 = vpack.c.b16 %v665, %v664
        %v680 = vpack.c.b16 %v667, %v666
        %v681 = vpack.c.b16 %v669, %v668
        %v682 = vpack.c.b16 %v671, %v670
        %v683 = vpack.c.b16 %v673, %v672
        %v684 = vpack.c.b16 %v675, %v674
        %v685 = vpack.c.b16 %v677, %v676
        %694 = vmatprep.subr.bf16.mxu0 0
        %695 = vmatpush1.bf16.msra.mxu0 %v678
        %696 = vmatprep.subr.bf16.mxu0 0
        %697 = vmatpush1.bf16.msra.mxu0 %v679
        %698 = vmatprep.subr.bf16.mxu0 0
        %699 = vmatpush1.bf16.msra.mxu0 %v680
        %700 = vmatprep.subr.bf16.mxu0 0
        %701 = vmatpush1.bf16.msra.mxu0 %v681
        %702 = vmatprep.subr.bf16.mxu0 0
        %703 = vmatpush1.bf16.msra.mxu0 %v682
        %704 = vmatprep.subr.bf16.mxu0 0
        %705 = vmatpush1.bf16.msra.mxu0 %v683
        %706 = vmatprep.subr.bf16.mxu0 0
        %707 = vmatpush1.bf16.msra.mxu0 %v684
        %708 = vmatprep.subr.bf16.mxu0 0
        %709 = vmatpush1.bf16.msra.mxu0 %v685
        %710 = vmatprep.subr.bf16.mxu0 0
        %711 = vmatpush1.bf16.msra.mxu0 0
        %712 = vmatprep.subr.bf16.mxu0 0
        %713 = vmatpush1.bf16.msra.mxu0 0
        %714 = vmatprep.subr.bf16.mxu0 0
        %715 = vmatpush1.bf16.msra.mxu0 0
        %716 = vmatprep.subr.bf16.mxu0 0
        %717 = vmatpush1.bf16.msra.mxu0 0
        %718 = vmatprep.subr.bf16.mxu0 0
        %719 = vmatpush1.bf16.msra.mxu0 0
        %720 = vmatprep.subr.bf16.mxu0 0
        %721 = vmatpush1.bf16.msra.mxu0 0
        %722 = vmatprep.subr.bf16.mxu0 0
        %723 = vmatpush1.bf16.msra.mxu0 0
        %724 = vmatprep.subr.bf16.mxu0 0
        %725 = vmatpush1.bf16.msra.mxu0 0
        %726 = vmatprep.mubr.bf16.mxu0 0
        %727 = vmatmul.mubr.bf16.gmra.mrb[0].mxu0 %v262
        %v728 = vpop.f32.mrb[0].mxu0
        %v729 = vadd.f32 %v645, %v728
        %v730 = vpop.f32.mrb[0].mxu0
        %v731 = vpop.f32.mrb[0].mxu0
        %v732 = vadd.f32 %v645, %v731
        %v733 = vpop.f32.mrb[0].mxu0
        %734 = vdwg.mxu0
        %v735 = vadd.f32 %v622, %v729
        %v736 = vadd.f32 %v623, %v732
        %v737 = vmax.f32 %v735, 0.0
        %v738 = vmax.f32 %v736, 0.0
        %v739 = vrot.slane %v737, 6
        %v740 = vrot.slane %v738, 6
        %vm741 = vcmp.lt.s32.totalorder %v220, 2
        %v742 = vsel %vm741, %v739, %v740
        %v743 = vsel %vm741, %v740, %v739
        %v744 = vsel %vm248, %v743, 0.0
        %v745 = vsel %vm249, %v742, 0.0
        %v746 = vpack.c.bf16 %v745, %v744
        %v747 = vpack.c.bf16 %v738, %v737
        %s748 = scalar_lea.vmem [#allocation5], 384
        %v749 = vld [vmem:[%s748] sm:$0xf]
        %v750 = vld [vmem:[%s748 + $0x4] sm:$0xf]
        %v751 = vld [vmem:[%s748 + $0x8] sm:$0xf]
        %v752 = vld [vmem:[%s748 + $0xc] sm:$0xf]
        %v753 = vld [vmem:[%s748 + $0x10] sm:$0xf]
        %v754 = vld [vmem:[%s748 + $0x14] sm:$0xf]
        %v755 = vld [vmem:[%s748 + $0x18] sm:$0xf]
        %v756 = vld [vmem:[%s748 + $0x1c] sm:$0xf]
        %v757 = vld [vmem:[%s748 + $0x20] sm:$0xf]
        %v758 = vld [vmem:[%s748 + $0x24] sm:$0xf]
        %v759 = vld [vmem:[%s748 + $0x28] sm:$0xf]
        %v760 = vld [vmem:[%s748 + $0x2c] sm:$0xf]
        %v761 = vld [vmem:[%s748 + $0x30] sm:$0xf]
        %v762 = vld [vmem:[%s748 + $0x34] sm:$0xf]
        %v763 = vld [vmem:[%s748 + $0x38] sm:$0xf]
        %v764 = vld [vmem:[%s748 + $0x3c] sm:$0xf]
        %v765 = vld [vmem:[%s748 + $0x40] sm:$0xf]
        %v766 = vld [vmem:[%s748 + $0x44] sm:$0xf]
        %v767 = vld [vmem:[%s748 + $0x48] sm:$0xf]
        %v768 = vld [vmem:[%s748 + $0x4c] sm:$0xf]
        %v769 = vld [vmem:[%s748 + $0x50] sm:$0xf]
        %v770 = vld [vmem:[%s748 + $0x54] sm:$0xf]
        %v771 = vld [vmem:[%s748 + $0x58] sm:$0xf]
        %v772 = vld [vmem:[%s748 + $0x5c] sm:$0xf]
        %v773 = vld [vmem:[%s748 + $0x60] sm:$0xf]
        %v774 = vld [vmem:[%s748 + $0x64] sm:$0xf]
        %v775 = vld [vmem:[%s748 + $0x68] sm:$0xf]
        %v776 = vld [vmem:[%s748 + $0x6c] sm:$0xf]
        %v777 = vld [vmem:[%s748 + $0x70] sm:$0xf]
        %v778 = vld [vmem:[%s748 + $0x74] sm:$0xf]
        %v779 = vld [vmem:[%s748 + $0x78] sm:$0xf]
        %v780 = vld [vmem:[%s748 + $0x7c] sm:$0xf]
        %v781 = vld [vmem:[#allocation7 + $0x3] sm:$0x1]
        %v782 = vlaneseq
        %v783 = vshrl.u32 %v782, 7
        %v784 = vsub.s32 0, %v783
        %v785 = vrot.slane %v781, %v784
        %v818 = vunpack.c.l.b16 %v749
        %v819 = vunpack.c.l.b16 %v750
        %v820 = vunpack.c.l.b16 %v751
        %v821 = vunpack.c.l.b16 %v752
        %v822 = vunpack.c.l.b16 %v753
        %v823 = vunpack.c.l.b16 %v754
        %v824 = vunpack.c.l.b16 %v755
        %v825 = vunpack.c.l.b16 %v756
        %v826 = vunpack.c.l.b16 %v757
        %v827 = vunpack.c.l.b16 %v758
        %v828 = vunpack.c.l.b16 %v759
        %v829 = vunpack.c.l.b16 %v760
        %v830 = vunpack.c.l.b16 %v761
        %v831 = vunpack.c.l.b16 %v762
        %v832 = vunpack.c.l.b16 %v763
        %v833 = vunpack.c.l.b16 %v764
        %v834 = vunpack.c.l.b16 %v765
        %v835 = vunpack.c.l.b16 %v766
        %v836 = vunpack.c.l.b16 %v767
        %v837 = vunpack.c.l.b16 %v768
        %v838 = vunpack.c.l.b16 %v769
        %v839 = vunpack.c.l.b16 %v770
        %v840 = vunpack.c.l.b16 %v771
        %v841 = vunpack.c.l.b16 %v772
        %v842 = vunpack.c.l.b16 %v773
        %v843 = vunpack.c.l.b16 %v774
        %v844 = vunpack.c.l.b16 %v775
        %v845 = vunpack.c.l.b16 %v776
        %v846 = vunpack.c.l.b16 %v777
        %v847 = vunpack.c.l.b16 %v778
        %v848 = vunpack.c.l.b16 %v779
        %v849 = vunpack.c.l.b16 %v780
        %v850 = vpack.c.b16 %v819, %v818
        %v851 = vpack.c.b16 %v821, %v820
        %v852 = vpack.c.b16 %v823, %v822
        %v853 = vpack.c.b16 %v825, %v824
        %v854 = vpack.c.b16 %v827, %v826
        %v855 = vpack.c.b16 %v829, %v828
        %v856 = vpack.c.b16 %v831, %v830
        %v857 = vpack.c.b16 %v833, %v832
        %v858 = vpack.c.b16 %v835, %v834
        %v859 = vpack.c.b16 %v837, %v836
        %v860 = vpack.c.b16 %v839, %v838
        %v861 = vpack.c.b16 %v841, %v840
        %v862 = vpack.c.b16 %v843, %v842
        %v863 = vpack.c.b16 %v845, %v844
        %v864 = vpack.c.b16 %v847, %v846
        %v865 = vpack.c.b16 %v849, %v848
        %882 = vmatprep.subr.bf16.mxu0 0
        %883 = vmatpush1.bf16.msra.mxu0 %v850
        %884 = vmatprep.subr.bf16.mxu0 0
        %885 = vmatpush1.bf16.msra.mxu0 %v851
        %886 = vmatprep.subr.bf16.mxu0 0
        %887 = vmatpush1.bf16.msra.mxu0 %v852
        %888 = vmatprep.subr.bf16.mxu0 0
        %889 = vmatpush1.bf16.msra.mxu0 %v853
        %890 = vmatprep.subr.bf16.mxu0 0
        %891 = vmatpush1.bf16.msra.mxu0 %v854
        %892 = vmatprep.subr.bf16.mxu0 0
        %893 = vmatpush1.bf16.msra.mxu0 %v855
        %894 = vmatprep.subr.bf16.mxu0 0
        %895 = vmatpush1.bf16.msra.mxu0 %v856
        %896 = vmatprep.subr.bf16.mxu0 0
        %897 = vmatpush1.bf16.msra.mxu0 %v857
        %898 = vmatprep.subr.bf16.mxu0 0
        %899 = vmatpush1.bf16.msra.mxu0 %v858
        %900 = vmatprep.subr.bf16.mxu0 0
        %901 = vmatpush1.bf16.msra.mxu0 %v859
        %902 = vmatprep.subr.bf16.mxu0 0
        %903 = vmatpush1.bf16.msra.mxu0 %v860
        %904 = vmatprep.subr.bf16.mxu0 0
        %905 = vmatpush1.bf16.msra.mxu0 %v861
        %906 = vmatprep.subr.bf16.mxu0 0
        %907 = vmatpush1.bf16.msra.mxu0 %v862
        %908 = vmatprep.subr.bf16.mxu0 0
        %909 = vmatpush1.bf16.msra.mxu0 %v863
        %910 = vmatprep.subr.bf16.mxu0 0
        %911 = vmatpush1.bf16.msra.mxu0 %v864
        %912 = vmatprep.subr.bf16.mxu0 0
        %913 = vmatpush1.bf16.msra.mxu0 %v865
        %914 = vmatprep.mubr.bf16.mxu0 %v747
        %915 = vmatmul.mubr.bf16.gmra.mrb[0].mxu0 %v746
        %v916 = vpop.f32.mrb[0].mxu0
        %v917 = vadd.f32 %v785, %v916
        %v918 = vpop.f32.mrb[0].mxu0
        %v919 = vpop.f32.mrb[0].mxu0
        %v920 = vadd.f32 %v785, %v919
        %v921 = vpop.f32.mrb[0].mxu0
        %922 = vdwg.mxu0
        %v923 = vmax.f32 %v917, 0.0
        %v924 = vmax.f32 %v920, 0.0
        %v925 = vrot.slane %v923, 6
        %v926 = vrot.slane %v924, 6
        %v927 = vsel %vm741, %v925, %v926
        %v928 = vsel %vm741, %v926, %v925
        %v929 = vsel %vm248, %v928, 0.0
        %v930 = vsel %vm249, %v927, 0.0
        %v931 = vpack.c.bf16 %v930, %v929
        %v932 = vpack.c.bf16 %v924, %v923
        %s933 = scalar_lea.vmem [#allocation5], 512
        %v934 = vld [vmem:[%s933] sm:$0xf]
        %v935 = vld [vmem:[%s933 + $0x4] sm:$0xf]
        %v936 = vld [vmem:[%s933 + $0x8] sm:$0xf]
        %v937 = vld [vmem:[%s933 + $0xc] sm:$0xf]
        %v938 = vld [vmem:[%s933 + $0x10] sm:$0xf]
        %v939 = vld [vmem:[%s933 + $0x14] sm:$0xf]
        %v940 = vld [vmem:[%s933 + $0x18] sm:$0xf]
        %v941 = vld [vmem:[%s933 + $0x1c] sm:$0xf]
        %v942 = vld [vmem:[%s933 + $0x20] sm:$0xf]
        %v943 = vld [vmem:[%s933 + $0x24] sm:$0xf]
        %v944 = vld [vmem:[%s933 + $0x28] sm:$0xf]
        %v945 = vld [vmem:[%s933 + $0x2c] sm:$0xf]
        %v946 = vld [vmem:[%s933 + $0x30] sm:$0xf]
        %v947 = vld [vmem:[%s933 + $0x34] sm:$0xf]
        %v948 = vld [vmem:[%s933 + $0x38] sm:$0xf]
        %v949 = vld [vmem:[%s933 + $0x3c] sm:$0xf]
        %v950 = vld [vmem:[%s933 + $0x40] sm:$0xf]
        %v951 = vld [vmem:[%s933 + $0x44] sm:$0xf]
        %v952 = vld [vmem:[%s933 + $0x48] sm:$0xf]
        %v953 = vld [vmem:[%s933 + $0x4c] sm:$0xf]
        %v954 = vld [vmem:[%s933 + $0x50] sm:$0xf]
        %v955 = vld [vmem:[%s933 + $0x54] sm:$0xf]
        %v956 = vld [vmem:[%s933 + $0x58] sm:$0xf]
        %v957 = vld [vmem:[%s933 + $0x5c] sm:$0xf]
        %v958 = vld [vmem:[%s933 + $0x60] sm:$0xf]
        %v959 = vld [vmem:[%s933 + $0x64] sm:$0xf]
        %v960 = vld [vmem:[%s933 + $0x68] sm:$0xf]
        %v961 = vld [vmem:[%s933 + $0x6c] sm:$0xf]
        %v962 = vld [vmem:[%s933 + $0x70] sm:$0xf]
        %v963 = vld [vmem:[%s933 + $0x74] sm:$0xf]
        %v964 = vld [vmem:[%s933 + $0x78] sm:$0xf]
        %v965 = vld [vmem:[%s933 + $0x7c] sm:$0xf]
        %v966 = vld [vmem:[#allocation7 + $0x4] sm:$0x1]
        %v967 = vlaneseq
        %v968 = vshrl.u32 %v967, 7
        %v969 = vsub.s32 0, %v968
        %v970 = vrot.slane %v966, %v969
        %v1003 = vunpack.c.l.b16 %v934
        %v1004 = vunpack.c.l.b16 %v935
        %v1005 = vunpack.c.l.b16 %v936
        %v1006 = vunpack.c.l.b16 %v937
        %v1007 = vunpack.c.l.b16 %v938
        %v1008 = vunpack.c.l.b16 %v939
        %v1009 = vunpack.c.l.b16 %v940
        %v1010 = vunpack.c.l.b16 %v941
        %v1011 = vunpack.c.l.b16 %v942
        %v1012 = vunpack.c.l.b16 %v943
        %v1013 = vunpack.c.l.b16 %v944
        %v1014 = vunpack.c.l.b16 %v945
        %v1015 = vunpack.c.l.b16 %v946
        %v1016 = vunpack.c.l.b16 %v947
        %v1017 = vunpack.c.l.b16 %v948
        %v1018 = vunpack.c.l.b16 %v949
        %v1019 = vunpack.c.l.b16 %v950
        %v1020 = vunpack.c.l.b16 %v951
        %v1021 = vunpack.c.l.b16 %v952
        %v1022 = vunpack.c.l.b16 %v953
        %v1023 = vunpack.c.l.b16 %v954
        %v1024 = vunpack.c.l.b16 %v955
        %v1025 = vunpack.c.l.b16 %v956
        %v1026 = vunpack.c.l.b16 %v957
        %v1027 = vunpack.c.l.b16 %v958
        %v1028 = vunpack.c.l.b16 %v959
        %v1029 = vunpack.c.l.b16 %v960
        %v1030 = vunpack.c.l.b16 %v961
        %v1031 = vunpack.c.l.b16 %v962
        %v1032 = vunpack.c.l.b16 %v963
        %v1033 = vunpack.c.l.b16 %v964
        %v1034 = vunpack.c.l.b16 %v965
        %v1035 = vpack.c.b16 %v1004, %v1003
        %v1036 = vpack.c.b16 %v1006, %v1005
        %v1037 = vpack.c.b16 %v1008, %v1007
        %v1038 = vpack.c.b16 %v1010, %v1009
        %v1039 = vpack.c.b16 %v1012, %v1011
        %v1040 = vpack.c.b16 %v1014, %v1013
        %v1041 = vpack.c.b16 %v1016, %v1015
        %v1042 = vpack.c.b16 %v1018, %v1017
        %v1043 = vpack.c.b16 %v1020, %v1019
        %v1044 = vpack.c.b16 %v1022, %v1021
        %v1045 = vpack.c.b16 %v1024, %v1023
        %v1046 = vpack.c.b16 %v1026, %v1025
        %v1047 = vpack.c.b16 %v1028, %v1027
        %v1048 = vpack.c.b16 %v1030, %v1029
        %v1049 = vpack.c.b16 %v1032, %v1031
        %v1050 = vpack.c.b16 %v1034, %v1033
        %1067 = vmatprep.subr.bf16.mxu0 0
        %1068 = vmatpush1.bf16.msra.mxu0 %v1035
        %1069 = vmatprep.subr.bf16.mxu0 0
        %1070 = vmatpush1.bf16.msra.mxu0 %v1036
        %1071 = vmatprep.subr.bf16.mxu0 0
        %1072 = vmatpush1.bf16.msra.mxu0 %v1037
        %1073 = vmatprep.subr.bf16.mxu0 0
        %1074 = vmatpush1.bf16.msra.mxu0 %v1038
        %1075 = vmatprep.subr.bf16.mxu0 0
        %1076 = vmatpush1.bf16.msra.mxu0 %v1039
        %1077 = vmatprep.subr.bf16.mxu0 0
        %1078 = vmatpush1.bf16.msra.mxu0 %v1040
        %1079 = vmatprep.subr.bf16.mxu0 0
        %1080 = vmatpush1.bf16.msra.mxu0 %v1041
        %1081 = vmatprep.subr.bf16.mxu0 0
        %1082 = vmatpush1.bf16.msra.mxu0 %v1042
        %1083 = vmatprep.subr.bf16.mxu0 0
        %1084 = vmatpush1.bf16.msra.mxu0 %v1043
        %1085 = vmatprep.subr.bf16.mxu0 0
        %1086 = vmatpush1.bf16.msra.mxu0 %v1044
        %1087 = vmatprep.subr.bf16.mxu0 0
        %1088 = vmatpush1.bf16.msra.mxu0 %v1045
        %1089 = vmatprep.subr.bf16.mxu0 0
        %1090 = vmatpush1.bf16.msra.mxu0 %v1046
        %1091 = vmatprep.subr.bf16.mxu0 0
        %1092 = vmatpush1.bf16.msra.mxu0 %v1047
        %1093 = vmatprep.subr.bf16.mxu0 0
        %1094 = vmatpush1.bf16.msra.mxu0 %v1048
        %1095 = vmatprep.subr.bf16.mxu0 0
        %1096 = vmatpush1.bf16.msra.mxu0 %v1049
        %1097 = vmatprep.subr.bf16.mxu0 0
        %1098 = vmatpush1.bf16.msra.mxu0 %v1050
        %1099 = vmatprep.mubr.bf16.mxu0 %v932
        %1100 = vmatmul.mubr.bf16.gmra.mrb[0].mxu0 %v931
        %v1101 = vpop.f32.mrb[0].mxu0
        %v1102 = vadd.f32 %v970, %v1101
        %v1103 = vpop.f32.mrb[0].mxu0
        %v1104 = vpop.f32.mrb[0].mxu0
        %v1105 = vadd.f32 %v970, %v1104
        %v1106 = vpop.f32.mrb[0].mxu0
        %1107 = vdwg.mxu0
        %v1108 = vmax.f32 %v1102, 0.0
        %v1109 = vmax.f32 %v1105, 0.0
        %s1110 = scalar_lea.vmem [#allocation5], 640
        %v1111 = vld [vmem:[%s1110] sm:$0xf]
        %v1112 = vld [vmem:[%s1110 + $0x4] sm:$0xf]
        %v1113 = vld [vmem:[%s1110 + $0x8] sm:$0xf]
        %v1114 = vld [vmem:[%s1110 + $0xc] sm:$0xf]
        %v1115 = vld [vmem:[%s1110 + $0x10] sm:$0xf]
        %v1116 = vld [vmem:[%s1110 + $0x14] sm:$0xf]
        %v1117 = vld [vmem:[%s1110 + $0x18] sm:$0xf]
        %v1118 = vld [vmem:[%s1110 + $0x1c] sm:$0xf]
        %v1119 = vld [vmem:[%s1110 + $0x20] sm:$0xf]
        %v1120 = vld [vmem:[%s1110 + $0x24] sm:$0xf]
        %v1121 = vld [vmem:[%s1110 + $0x28] sm:$0xf]
        %v1122 = vld [vmem:[%s1110 + $0x2c] sm:$0xf]
        %v1123 = vld [vmem:[%s1110 + $0x30] sm:$0xf]
        %v1124 = vld [vmem:[%s1110 + $0x34] sm:$0xf]
        %v1125 = vld [vmem:[%s1110 + $0x38] sm:$0xf]
        %v1126 = vld [vmem:[%s1110 + $0x3c] sm:$0xf]
        %v1127 = vld [vmem:[#allocation7 + $0x5] sm:$0x1]
        %v1128 = vlaneseq
        %v1129 = vshrl.u32 %v1128, 7
        %v1130 = vsub.s32 0, %v1129
        %v1131 = vrot.slane %v1127, %v1130
        %v1148 = vunpack.c.l.b16 %v1111
        %v1149 = vunpack.c.l.b16 %v1112
        %v1150 = vunpack.c.l.b16 %v1113
        %v1151 = vunpack.c.l.b16 %v1114
        %v1152 = vunpack.c.l.b16 %v1115
        %v1153 = vunpack.c.l.b16 %v1116
        %v1154 = vunpack.c.l.b16 %v1117
        %v1155 = vunpack.c.l.b16 %v1118
        %v1156 = vunpack.c.l.b16 %v1119
        %v1157 = vunpack.c.l.b16 %v1120
        %v1158 = vunpack.c.l.b16 %v1121
        %v1159 = vunpack.c.l.b16 %v1122
        %v1160 = vunpack.c.l.b16 %v1123
        %v1161 = vunpack.c.l.b16 %v1124
        %v1162 = vunpack.c.l.b16 %v1125
        %v1163 = vunpack.c.l.b16 %v1126
        %v1164 = vpack.c.b16 %v1149, %v1148
        %v1165 = vpack.c.b16 %v1151, %v1150
        %v1166 = vpack.c.b16 %v1153, %v1152
        %v1167 = vpack.c.b16 %v1155, %v1154
        %v1168 = vpack.c.b16 %v1157, %v1156
        %v1169 = vpack.c.b16 %v1159, %v1158
        %v1170 = vpack.c.b16 %v1161, %v1160
        %v1171 = vpack.c.b16 %v1163, %v1162
        %1180 = vmatprep.subr.bf16.mxu0 0
        %1181 = vmatpush1.bf16.msra.mxu0 %v1164
        %1182 = vmatprep.subr.bf16.mxu0 0
        %1183 = vmatpush1.bf16.msra.mxu0 %v1165
        %1184 = vmatprep.subr.bf16.mxu0 0
        %1185 = vmatpush1.bf16.msra.mxu0 %v1166
        %1186 = vmatprep.subr.bf16.mxu0 0
        %1187 = vmatpush1.bf16.msra.mxu0 %v1167
        %1188 = vmatprep.subr.bf16.mxu0 0
        %1189 = vmatpush1.bf16.msra.mxu0 %v1168
        %1190 = vmatprep.subr.bf16.mxu0 0
        %1191 = vmatpush1.bf16.msra.mxu0 %v1169
        %1192 = vmatprep.subr.bf16.mxu0 0
        %1193 = vmatpush1.bf16.msra.mxu0 %v1170
        %1194 = vmatprep.subr.bf16.mxu0 0
        %1195 = vmatpush1.bf16.msra.mxu0 %v1171
        %1196 = vmatprep.subr.bf16.mxu0 0
        %1197 = vmatpush1.bf16.msra.mxu0 0
        %1198 = vmatprep.subr.bf16.mxu0 0
        %1199 = vmatpush1.bf16.msra.mxu0 0
        %1200 = vmatprep.subr.bf16.mxu0 0
        %1201 = vmatpush1.bf16.msra.mxu0 0
        %1202 = vmatprep.subr.bf16.mxu0 0
        %1203 = vmatpush1.bf16.msra.mxu0 0
        %1204 = vmatprep.subr.bf16.mxu0 0
        %1205 = vmatpush1.bf16.msra.mxu0 0
        %1206 = vmatprep.subr.bf16.mxu0 0
        %1207 = vmatpush1.bf16.msra.mxu0 0
        %1208 = vmatprep.subr.bf16.mxu0 0
        %1209 = vmatpush1.bf16.msra.mxu0 0
        %1210 = vmatprep.subr.bf16.mxu0 0
        %1211 = vmatpush1.bf16.msra.mxu0 0
        %1212 = vmatprep.mubr.bf16.mxu0 0
        %1213 = vmatmul.mubr.bf16.gmra.mrb[0].mxu0 %v747
        %v1214 = vpop.f32.mrb[0].mxu0
        %v1215 = vadd.f32 %v1131, %v1214
        %v1216 = vpop.f32.mrb[0].mxu0
        %v1217 = vpop.f32.mrb[0].mxu0
        %v1218 = vadd.f32 %v1131, %v1217
        %v1219 = vpop.f32.mrb[0].mxu0
        %1220 = vdwg.mxu0
        %v1221 = vadd.f32 %v1108, %v1215
        %v1222 = vadd.f32 %v1109, %v1218
        %v1223 = vmax.f32 %v1221, 0.0
        %v1224 = vmax.f32 %v1222, 0.0
        %v1225 = vrot.slane %v1223, 4
        %v1226 = vrot.slane %v1224, 4
        %vm1227 = vcmp.lt.s32.totalorder %v220, 4
        %v1228 = vsel %vm1227, %v1225, %v1226
        %v1229 = vsel %vm1227, %v1226, %v1225
        %v1230 = vsel %vm250, %v1229, 0.0
        %v1231 = vsel %vm251, %v1228, 0.0
        %v1232 = vpack.c.bf16 %v1231, %v1230
        %v1233 = vpack.c.bf16 %v1224, %v1223
        %s1234 = scalar_lea.vmem [#allocation5], 768
        %v1235 = vld [vmem:[%s1234] sm:$0xf]
        %v1236 = vld [vmem:[%s1234 + $0x4] sm:$0xf]
        %v1237 = vld [vmem:[%s1234 + $0x8] sm:$0xf]
        %v1238 = vld [vmem:[%s1234 + $0xc] sm:$0xf]
        %v1239 = vld [vmem:[%s1234 + $0x10] sm:$0xf]
        %v1240 = vld [vmem:[%s1234 + $0x14] sm:$0xf]
        %v1241 = vld [vmem:[%s1234 + $0x18] sm:$0xf]
        %v1242 = vld [vmem:[%s1234 + $0x1c] sm:$0xf]
        %v1243 = vld [vmem:[%s1234 + $0x20] sm:$0xf]
        %v1244 = vld [vmem:[%s1234 + $0x24] sm:$0xf]
        %v1245 = vld [vmem:[%s1234 + $0x28] sm:$0xf]
        %v1246 = vld [vmem:[%s1234 + $0x2c] sm:$0xf]
        %v1247 = vld [vmem:[%s1234 + $0x30] sm:$0xf]
        %v1248 = vld [vmem:[%s1234 + $0x34] sm:$0xf]
        %v1249 = vld [vmem:[%s1234 + $0x38] sm:$0xf]
        %v1250 = vld [vmem:[%s1234 + $0x3c] sm:$0xf]
        %v1251 = vld [vmem:[%s1234 + $0x40] sm:$0xf]
        %v1252 = vld [vmem:[%s1234 + $0x44] sm:$0xf]
        %v1253 = vld [vmem:[%s1234 + $0x48] sm:$0xf]
        %v1254 = vld [vmem:[%s1234 + $0x4c] sm:$0xf]
        %v1255 = vld [vmem:[%s1234 + $0x50] sm:$0xf]
        %v1256 = vld [vmem:[%s1234 + $0x54] sm:$0xf]
        %v1257 = vld [vmem:[%s1234 + $0x58] sm:$0xf]
        %v1258 = vld [vmem:[%s1234 + $0x5c] sm:$0xf]
        %v1259 = vld [vmem:[%s1234 + $0x60] sm:$0xf]
        %v1260 = vld [vmem:[%s1234 + $0x64] sm:$0xf]
        %v1261 = vld [vmem:[%s1234 + $0x68] sm:$0xf]
        %v1262 = vld [vmem:[%s1234 + $0x6c] sm:$0xf]
        %v1263 = vld [vmem:[%s1234 + $0x70] sm:$0xf]
        %v1264 = vld [vmem:[%s1234 + $0x74] sm:$0xf]
        %v1265 = vld [vmem:[%s1234 + $0x78] sm:$0xf]
        %v1266 = vld [vmem:[%s1234 + $0x7c] sm:$0xf]
        %v1267 = vld [vmem:[#allocation7 + $0x6] sm:$0x1]
        %v1268 = vlaneseq
        %v1269 = vshrl.u32 %v1268, 7
        %v1270 = vsub.s32 0, %v1269
        %v1271 = vrot.slane %v1267, %v1270
        %v1304 = vunpack.c.l.b16 %v1235
        %v1305 = vunpack.c.l.b16 %v1236
        %v1306 = vunpack.c.l.b16 %v1237
        %v1307 = vunpack.c.l.b16 %v1238
        %v1308 = vunpack.c.l.b16 %v1239
        %v1309 = vunpack.c.l.b16 %v1240
        %v1310 = vunpack.c.l.b16 %v1241
        %v1311 = vunpack.c.l.b16 %v1242
        %v1312 = vunpack.c.l.b16 %v1243
        %v1313 = vunpack.c.l.b16 %v1244
        %v1314 = vunpack.c.l.b16 %v1245
        %v1315 = vunpack.c.l.b16 %v1246
        %v1316 = vunpack.c.l.b16 %v1247
        %v1317 = vunpack.c.l.b16 %v1248
        %v1318 = vunpack.c.l.b16 %v1249
        %v1319 = vunpack.c.l.b16 %v1250
        %v1320 = vunpack.c.l.b16 %v1251
        %v1321 = vunpack.c.l.b16 %v1252
        %v1322 = vunpack.c.l.b16 %v1253
        %v1323 = vunpack.c.l.b16 %v1254
        %v1324 = vunpack.c.l.b16 %v1255
        %v1325 = vunpack.c.l.b16 %v1256
        %v1326 = vunpack.c.l.b16 %v1257
        %v1327 = vunpack.c.l.b16 %v1258
        %v1328 = vunpack.c.l.b16 %v1259
        %v1329 = vunpack.c.l.b16 %v1260
        %v1330 = vunpack.c.l.b16 %v1261
        %v1331 = vunpack.c.l.b16 %v1262
        %v1332 = vunpack.c.l.b16 %v1263
        %v1333 = vunpack.c.l.b16 %v1264
        %v1334 = vunpack.c.l.b16 %v1265
        %v1335 = vunpack.c.l.b16 %v1266
        %v1336 = vpack.c.b16 %v1305, %v1304
        %v1337 = vpack.c.b16 %v1307, %v1306
        %v1338 = vpack.c.b16 %v1309, %v1308
        %v1339 = vpack.c.b16 %v1311, %v1310
        %v1340 = vpack.c.b16 %v1313, %v1312
        %v1341 = vpack.c.b16 %v1315, %v1314
        %v1342 = vpack.c.b16 %v1317, %v1316
        %v1343 = vpack.c.b16 %v1319, %v1318
        %v1344 = vpack.c.b16 %v1321, %v1320
        %v1345 = vpack.c.b16 %v1323, %v1322
        %v1346 = vpack.c.b16 %v1325, %v1324
        %v1347 = vpack.c.b16 %v1327, %v1326
        %v1348 = vpack.c.b16 %v1329, %v1328
        %v1349 = vpack.c.b16 %v1331, %v1330
        %v1350 = vpack.c.b16 %v1333, %v1332
        %v1351 = vpack.c.b16 %v1335, %v1334
        %1368 = vmatprep.subr.bf16.mxu0 0
        %1369 = vmatpush1.bf16.msra.mxu0 %v1336
        %1370 = vmatprep.subr.bf16.mxu0 0
        %1371 = vmatpush1.bf16.msra.mxu0 %v1337
        %1372 = vmatprep.subr.bf16.mxu0 0
        %1373 = vmatpush1.bf16.msra.mxu0 %v1338
        %1374 = vmatprep.subr.bf16.mxu0 0
        %1375 = vmatpush1.bf16.msra.mxu0 %v1339
        %1376 = vmatprep.subr.bf16.mxu0 0
        %1377 = vmatpush1.bf16.msra.mxu0 %v1340
        %1378 = vmatprep.subr.bf16.mxu0 0
        %1379 = vmatpush1.bf16.msra.mxu0 %v1341
        %1380 = vmatprep.subr.bf16.mxu0 0
        %1381 = vmatpush1.bf16.msra.mxu0 %v1342
        %1382 = vmatprep.subr.bf16.mxu0 0
        %1383 = vmatpush1.bf16.msra.mxu0 %v1343
        %1384 = vmatprep.subr.bf16.mxu0 0
        %1385 = vmatpush1.bf16.msra.mxu0 %v1344
        %1386 = vmatprep.subr.bf16.mxu0 0
        %1387 = vmatpush1.bf16.msra.mxu0 %v1345
        %1388 = vmatprep.subr.bf16.mxu0 0
        %1389 = vmatpush1.bf16.msra.mxu0 %v1346
        %1390 = vmatprep.subr.bf16.mxu0 0
        %1391 = vmatpush1.bf16.msra.mxu0 %v1347
        %1392 = vmatprep.subr.bf16.mxu0 0
        %1393 = vmatpush1.bf16.msra.mxu0 %v1348
        %1394 = vmatprep.subr.bf16.mxu0 0
        %1395 = vmatpush1.bf16.msra.mxu0 %v1349
        %1396 = vmatprep.subr.bf16.mxu0 0
        %1397 = vmatpush1.bf16.msra.mxu0 %v1350
        %1398 = vmatprep.subr.bf16.mxu0 0
        %1399 = vmatpush1.bf16.msra.mxu0 %v1351
        %1400 = vmatprep.mubr.bf16.mxu0 %v1233
        %1401 = vmatmul.mubr.bf16.gmra.mrb[0].mxu0 %v1232
        %v1402 = vpop.f32.mrb[0].mxu0
        %v1403 = vadd.f32 %v1271, %v1402
        %v1404 = vpop.f32.mrb[0].mxu0
        %v1405 = vpop.f32.mrb[0].mxu0
        %v1406 = vadd.f32 %v1271, %v1405
        %v1407 = vpop.f32.mrb[0].mxu0
        %1408 = vdwg.mxu0
        %v1409 = vmax.f32 %v1403, 0.0
        %v1410 = vmax.f32 %v1406, 0.0
        %v1411 = vrot.slane %v1409, 4
        %v1412 = vrot.slane %v1410, 4
        %v1413 = vsel %vm1227, %v1411, %v1412
        %v1414 = vsel %vm1227, %v1412, %v1411
        %v1415 = vsel %vm250, %v1414, 0.0
        %v1416 = vsel %vm251, %v1413, 0.0
        %v1417 = vpack.c.bf16 %v1416, %v1415
        %v1418 = vpack.c.bf16 %v1410, %v1409
        %s1419 = scalar_lea.vmem [#allocation5], 896
        %v1420 = vld [vmem:[%s1419] sm:$0xf]
        %v1421 = vld [vmem:[%s1419 + $0x4] sm:$0xf]
        %v1422 = vld [vmem:[%s1419 + $0x8] sm:$0xf]
        %v1423 = vld [vmem:[%s1419 + $0xc] sm:$0xf]
        %v1424 = vld [vmem:[%s1419 + $0x10] sm:$0xf]
        %v1425 = vld [vmem:[%s1419 + $0x14] sm:$0xf]
        %v1426 = vld [vmem:[%s1419 + $0x18] sm:$0xf]
        %v1427 = vld [vmem:[%s1419 + $0x1c] sm:$0xf]
        %v1428 = vld [vmem:[%s1419 + $0x20] sm:$0xf]
        %v1429 = vld [vmem:[%s1419 + $0x24] sm:$0xf]
        %v1430 = vld [vmem:[%s1419 + $0x28] sm:$0xf]
        %v1431 = vld [vmem:[%s1419 + $0x2c] sm:$0xf]
        %v1432 = vld [vmem:[%s1419 + $0x30] sm:$0xf]
        %v1433 = vld [vmem:[%s1419 + $0x34] sm:$0xf]
        %v1434 = vld [vmem:[%s1419 + $0x38] sm:$0xf]
        %v1435 = vld [vmem:[%s1419 + $0x3c] sm:$0xf]
        %v1436 = vld [vmem:[%s1419 + $0x40] sm:$0xf]
        %v1437 = vld [vmem:[%s1419 + $0x44] sm:$0xf]
        %v1438 = vld [vmem:[%s1419 + $0x48] sm:$0xf]
        %v1439 = vld [vmem:[%s1419 + $0x4c] sm:$0xf]
        %v1440 = vld [vmem:[%s1419 + $0x50] sm:$0xf]
        %v1441 = vld [vmem:[%s1419 + $0x54] sm:$0xf]
        %v1442 = vld [vmem:[%s1419 + $0x58] sm:$0xf]
        %v1443 = vld [vmem:[%s1419 + $0x5c] sm:$0xf]
        %v1444 = vld [vmem:[%s1419 + $0x60] sm:$0xf]
        %v1445 = vld [vmem:[%s1419 + $0x64] sm:$0xf]
        %v1446 = vld [vmem:[%s1419 + $0x68] sm:$0xf]
        %v1447 = vld [vmem:[%s1419 + $0x6c] sm:$0xf]
        %v1448 = vld [vmem:[%s1419 + $0x70] sm:$0xf]
        %v1449 = vld [vmem:[%s1419 + $0x74] sm:$0xf]
        %v1450 = vld [vmem:[%s1419 + $0x78] sm:$0xf]
        %v1451 = vld [vmem:[%s1419 + $0x7c] sm:$0xf]
        %v1452 = vld [vmem:[#allocation7 + $0x7] sm:$0x1]
        %v1453 = vlaneseq
        %v1454 = vshrl.u32 %v1453, 7
        %v1455 = vsub.s32 0, %v1454
        %v1456 = vrot.slane %v1452, %v1455
        %v1489 = vunpack.c.l.b16 %v1420
        %v1490 = vunpack.c.l.b16 %v1421
        %v1491 = vunpack.c.l.b16 %v1422
        %v1492 = vunpack.c.l.b16 %v1423
        %v1493 = vunpack.c.l.b16 %v1424
        %v1494 = vunpack.c.l.b16 %v1425
        %v1495 = vunpack.c.l.b16 %v1426
        %v1496 = vunpack.c.l.b16 %v1427
        %v1497 = vunpack.c.l.b16 %v1428
        %v1498 = vunpack.c.l.b16 %v1429
        %v1499 = vunpack.c.l.b16 %v1430
        %v1500 = vunpack.c.l.b16 %v1431
        %v1501 = vunpack.c.l.b16 %v1432
        %v1502 = vunpack.c.l.b16 %v1433
        %v1503 = vunpack.c.l.b16 %v1434
        %v1504 = vunpack.c.l.b16 %v1435
        %v1505 = vunpack.c.l.b16 %v1436
        %v1506 = vunpack.c.l.b16 %v1437
        %v1507 = vunpack.c.l.b16 %v1438
        %v1508 = vunpack.c.l.b16 %v1439
        %v1509 = vunpack.c.l.b16 %v1440
        %v1510 = vunpack.c.l.b16 %v1441
        %v1511 = vunpack.c.l.b16 %v1442
        %v1512 = vunpack.c.l.b16 %v1443
        %v1513 = vunpack.c.l.b16 %v1444
        %v1514 = vunpack.c.l.b16 %v1445
        %v1515 = vunpack.c.l.b16 %v1446
        %v1516 = vunpack.c.l.b16 %v1447
        %v1517 = vunpack.c.l.b16 %v1448
        %v1518 = vunpack.c.l.b16 %v1449
        %v1519 = vunpack.c.l.b16 %v1450
        %v1520 = vunpack.c.l.b16 %v1451
        %v1521 = vpack.c.b16 %v1490, %v1489
        %v1522 = vpack.c.b16 %v1492, %v1491
        %v1523 = vpack.c.b16 %v1494, %v1493
        %v1524 = vpack.c.b16 %v1496, %v1495
        %v1525 = vpack.c.b16 %v1498, %v1497
        %v1526 = vpack.c.b16 %v1500, %v1499
        %v1527 = vpack.c.b16 %v1502, %v1501
        %v1528 = vpack.c.b16 %v1504, %v1503
        %v1529 = vpack.c.b16 %v1506, %v1505
        %v1530 = vpack.c.b16 %v1508, %v1507
        %v1531 = vpack.c.b16 %v1510, %v1509
        %v1532 = vpack.c.b16 %v1512, %v1511
        %v1533 = vpack.c.b16 %v1514, %v1513
        %v1534 = vpack.c.b16 %v1516, %v1515
        %v1535 = vpack.c.b16 %v1518, %v1517
        %v1536 = vpack.c.b16 %v1520, %v1519
        %1553 = vmatprep.subr.bf16.mxu0 0
        %1554 = vmatpush1.bf16.msra.mxu0 %v1521
        %1555 = vmatprep.subr.bf16.mxu0 0
        %1556 = vmatpush1.bf16.msra.mxu0 %v1522
        %1557 = vmatprep.subr.bf16.mxu0 0
        %1558 = vmatpush1.bf16.msra.mxu0 %v1523
        %1559 = vmatprep.subr.bf16.mxu0 0
        %1560 = vmatpush1.bf16.msra.mxu0 %v1524
        %1561 = vmatprep.subr.bf16.mxu0 0
        %1562 = vmatpush1.bf16.msra.mxu0 %v1525
        %1563 = vmatprep.subr.bf16.mxu0 0
        %1564 = vmatpush1.bf16.msra.mxu0 %v1526
        %1565 = vmatprep.subr.bf16.mxu0 0
        %1566 = vmatpush1.bf16.msra.mxu0 %v1527
        %1567 = vmatprep.subr.bf16.mxu0 0
        %1568 = vmatpush1.bf16.msra.mxu0 %v1528
        %1569 = vmatprep.subr.bf16.mxu0 0
        %1570 = vmatpush1.bf16.msra.mxu0 %v1529
        %1571 = vmatprep.subr.bf16.mxu0 0
        %1572 = vmatpush1.bf16.msra.mxu0 %v1530
        %1573 = vmatprep.subr.bf16.mxu0 0
        %1574 = vmatpush1.bf16.msra.mxu0 %v1531
        %1575 = vmatprep.subr.bf16.mxu0 0
        %1576 = vmatpush1.bf16.msra.mxu0 %v1532
        %1577 = vmatprep.subr.bf16.mxu0 0
        %1578 = vmatpush1.bf16.msra.mxu0 %v1533
        %1579 = vmatprep.subr.bf16.mxu0 0
        %1580 = vmatpush1.bf16.msra.mxu0 %v1534
        %1581 = vmatprep.subr.bf16.mxu0 0
        %1582 = vmatpush1.bf16.msra.mxu0 %v1535
        %1583 = vmatprep.subr.bf16.mxu0 0
        %1584 = vmatpush1.bf16.msra.mxu0 %v1536
        %1585 = vmatprep.mubr.bf16.mxu0 %v1418
        %1586 = vmatmul.mubr.bf16.gmra.mrb[0].mxu0 %v1417
        %v1587 = vpop.f32.mrb[0].mxu0
        %v1588 = vadd.f32 %v1456, %v1587
        %v1589 = vpop.f32.mrb[0].mxu0
        %v1590 = vpop.f32.mrb[0].mxu0
        %v1591 = vadd.f32 %v1456, %v1590
        %v1592 = vpop.f32.mrb[0].mxu0
        %1593 = vdwg.mxu0
        %v1594 = vmax.f32 %v1588, 0.0
        %v1595 = vmax.f32 %v1591, 0.0
        %v1596 = vadd.f32 %v1594, %v1223
        %v1597 = vadd.f32 %v1595, %v1224
        %v1598 = vmax.f32 %v1596, 0.0
        %v1599 = vmax.f32 %v1597, 0.0
        %1600 = vst [vmem:[%s215] sm:$0xff] %v1598
        %1601 = vst [vmem:[%s215 + $0x8] sm:$0xff] %v1599
        %s1602 = sand.u32 %s97, 1
        %s1603 = scalar_lea.sflag [#allocation4], %s1602
        %s1604 = sand.u32 %s97, 1
        %s1605 = smul.addr %s1604, 16
        %s1606 = scalar_lea.vmem [#allocation8], %s1605
        // Predicated region
        $region45: #{tpu_custom_call.1} parent=31 // pred_check
          %p1607 = pneg %p107
        $region46: #{tpu_custom_call.1} parent=31 // pred_check_branch
          %1609 = sbr.rel (%p1607) target = $region48
        $region47: #{tpu_custom_call.1} parent=31 // pred_region
          %s1610 = smul.u32 2, %s21
          %s1612 = ssub.s32 256, 256
          %1613 = vsyncadd %s1603, %s1612
          %s1614 = smul.addr %s1610, 128
          %s1615 = scalar_lea.hbm %s3, %s1614
          %s1616 = sshll.u32 %s1606, 4
          %s1617 = int_to_ptr.vmem [resolvable:$true] %s1616
          %1622 = dma.vmem_to_hbm [thread:$0]  %s1617, 256, %s1615, %s1603, 128, 128, 8
        $region48: #{tpu_custom_call.1} parent=31 // pred_fallthru
          _
      $region32: #{tpu_custom_call.1} parent=5 // pred_fallthru
        _
      %p1623 = scmp.le.s32.totalorder 2, %s16
      // Predicated region
      $region49: #{tpu_custom_call.1} parent=5 // pred_check
        %p1624 = pneg %p1623
      $region50: #{tpu_custom_call.1} parent=5 // pred_check_branch
        %1626 = sbr.rel (%p1624) target = $region52
      $region51: #{tpu_custom_call.1} parent=5 // pred_region
        %s1627 = ssub.s32 %s16, 2
        // Predicated region
        $region53: #{tpu_custom_call.1} parent=51 // pred_check
          %p1628 = pneg %p113
        $region54: #{tpu_custom_call.1} parent=51 // pred_check_branch
          %1630 = sbr.rel (%p1628) target = $region56
        $region55: #{tpu_custom_call.1} parent=51 // pred_region
          %s1631 = sand.u32 %s98, 1
          %s1632 = scalar_lea.sflag [#allocation4], %s1631
          %s1633 = sand.u32 %s98, 1
          %s1634 = smul.addr %s1633, 16
          %s1635 = scalar_lea.vmem [#allocation8], %s1634
          %1636 = dma.done %s1632, 256
        $region56: #{tpu_custom_call.1} parent=51 // pred_fallthru
          _
      $region52: #{tpu_custom_call.1} parent=5 // pred_fallthru
        _
    $region6: #{tpu_custom_call.1} parent=1 // loop_footer
      %s20 = sadd.s32 1, %s16
    $region7: #{tpu_custom_call.1} parent=1 // loop_footer_branch
      %15 = sbr.rel target = $region3
    $region8: #{tpu_custom_call.1} parent=1 // loop_exit
      _
    %1637 = vsyncpa [#allocation3], 1
    %s1638 = scalar_lea.sflag [#allocation3], 1
    %1639 = vsyncpa %s1638, 1
    %1640 = vsyncpa [#allocation6], 1
    %1641 = vsyncpa [#allocation4], 1
    %s1642 = scalar_lea.sflag [#allocation4], 1
    %1643 = vsyncpa %s1642, 1

</llo_original>
